<compile_context>
chip_gen: v7x
topology: tpu7x:2x2x1
jax: 0.10.0
libtpu: 0.0.40
codegen_flags: <defaults>
</compile_context>

<pallas_src>
import functools

import jax
import jax.numpy as jnp
from jax.experimental import pallas as pl
from jax.experimental.pallas import tpu as pltpu

EPS = 1e-5       # PyTorch BatchNorm2d default
SUBLANE = 8


def _conv_tile(x_ref, w_ref, *, ksize, h_out, w_out):
    """Conv for one image block.

    x_ref : (H+2p, W+2p, Cin)  padded NHWC image (compute dtype)
    w_ref : (Cout_p, K)        folded weights, K = ksize*ksize*Cin
    returns (Cout_p, H_out*W_out) f32 - Cout on sublanes, spatial on lanes.
    """
    x = x_ref[...]
    cin = x.shape[-1]
    taps = []
    for kh in range(ksize):
        for kw in range(ksize):
            t = x[kh:kh + h_out, kw:kw + w_out, :]          # (H_out, W_out, Cin)
            taps.append(t.reshape(h_out * w_out, cin))       # (M, Cin)
    patches = jnp.concatenate(taps, axis=1)                  # (M, K)
    # (Cout_p, K) @ (K, M) -> (Cout_p, M); M is lane-dense.
    return jnp.dot(w_ref[...], patches.T,
                   preferred_element_type=jnp.float32)


def _stats_kernel(x_ref, w_ref, stats_ref, *, ksize, h_out, w_out):
    """Phase 1: per-image partial BN sums. Conv never leaves VMEM."""
    conv = _conv_tile(x_ref, w_ref, ksize=ksize, h_out=h_out, w_out=w_out)
    s = jnp.sum(conv, axis=1, keepdims=True)                 # (Cout_p, 1)
    sq = jnp.sum(conv * conv, axis=1, keepdims=True)         # (Cout_p, 1)
    stats_ref[...] = jnp.concatenate([s, sq], axis=1)        # single store


def _apply_kernel(x_ref, w_ref, scale_ref, shift_ref, o_ref, *,
                  ksize, h_out, w_out, cout):
    """Phase 2: recompute conv tile and apply folded BN affine."""
    conv = _conv_tile(x_ref, w_ref, ksize=ksize, h_out=h_out, w_out=w_out)
    y = conv * scale_ref[...] + shift_ref[...]               # (Cout_p, M)
    o_ref[...] = y[:cout, :]


@functools.partial(jax.jit,
                   static_argnames=("kernel_size", "stride", "pad",
                                    "compute_dtype"))
def conv_bn(x_nchw, w_oihw, gamma, beta, *, kernel_size=3, stride=1, pad=1,
            compute_dtype=jnp.float32):
    if stride != 1:
        raise NotImplementedError("stride > 1 not implemented")  # TODO(synk)

    n, cin, h, w = x_nchw.shape
    cout = w_oihw.shape[0]
    h_out = h + 2 * pad - kernel_size + 1
    w_out = w + 2 * pad - kernel_size + 1
    hw = h_out * w_out
    k_dim = kernel_size * kernel_size * cin
    cout_p = -(-cout // SUBLANE) * SUBLANE
    hp, wp = h + 2 * pad, w + 2 * pad

    # ---- layout glue (~1x input bytes; no 9x im2col in HBM) ----------------
    x_pad = jnp.pad(
        jnp.transpose(x_nchw, (0, 2, 3, 1)).astype(compute_dtype),
        ((0, 0), (pad, pad), (pad, pad), (0, 0)))
    # (Cout, Cin, KH, KW) -> (Cout, KH*KW*Cin), tap order (kh, kw, cin);
    # pad Cout to a multiple of 8 sublanes (8 -> 8: no padding here).
    w_f = jnp.transpose(w_oihw, (0, 2, 3, 1)).reshape(cout, k_dim)
    w_f = jnp.pad(w_f, ((0, cout_p - cout), (0, 0))).astype(compute_dtype)

    cparams = pltpu.CompilerParams(
        dimension_semantics=("parallel",),
        vmem_limit_bytes=32 * 1024 * 1024,
    )
    x_spec = pl.BlockSpec((None, hp, wp, cin), lambda i: (i, 0, 0, 0))
    w_spec = pl.BlockSpec((cout_p, k_dim), lambda i: (0, 0))

    # ---- phase 1: per-image partial BN sums --------------------------------
    stats = pl.pallas_call(
        functools.partial(_stats_kernel, ksize=kernel_size,
                          h_out=h_out, w_out=w_out),
        out_shape=jax.ShapeDtypeStruct((n, cout_p, 2), jnp.float32),
        grid=(n,),
        in_specs=[x_spec, w_spec],
        out_specs=pl.BlockSpec((None, cout_p, 2), lambda i: (i, 0, 0)),
        compiler_params=cparams,
    )(x_pad, w_f)

    # ---- tiny cross-tile reduce + folded affine (computed once) ------------
    tot = jnp.sum(stats, axis=0)                              # (Cout_p, 2)
    count = float(n * hw)
    mean = tot[:, 0] / count
    var = tot[:, 1] / count - mean * mean                     # biased variance
    gamma_p = jnp.pad(gamma.astype(jnp.float32), (0, cout_p - cout))
    beta_p = jnp.pad(beta.astype(jnp.float32), (0, cout_p - cout))
    scale = gamma_p * jax.lax.rsqrt(var + EPS)                # gamma/sqrt(var+eps)
    shift = beta_p - mean * scale
    scale = scale.reshape(cout_p, 1)
    shift = shift.reshape(cout_p, 1)

    # ---- phase 2: recompute conv, apply BN, write NCHW-compatible layout ---
    out_flat = pl.pallas_call(
        functools.partial(_apply_kernel, ksize=kernel_size,
                          h_out=h_out, w_out=w_out, cout=cout),
        out_shape=jax.ShapeDtypeStruct((n, cout, hw), jnp.float32),
        grid=(n,),
        in_specs=[x_spec, w_spec,
                  pl.BlockSpec((cout_p, 1), lambda i: (0, 0)),
                  pl.BlockSpec((cout_p, 1), lambda i: (0, 0))],
        out_specs=pl.BlockSpec((None, cout, hw), lambda i: (i, 0, 0)),
        compiler_params=cparams,
    )(x_pad, w_f, scale, shift)

    # (N, Cout, H*W) -> (N, Cout, H, W): identical row-major layout -> free.
    return out_flat.reshape(n, cout, h_out, w_out)


def reference_conv_bn(x_nchw, w_oihw, gamma, beta, *, stride=1, pad=1):
    conv = jax.lax.conv_general_dilated(
        x_nchw.astype(jnp.float32), w_oihw.astype(jnp.float32),
        window_strides=(stride, stride), padding=((pad, pad), (pad, pad)),
        dimension_numbers=("NCHW", "OIHW", "NCHW"))
    mean = conv.mean(axis=(0, 2, 3), keepdims=True)
    var = ((conv - mean) ** 2).mean(axis=(0, 2, 3), keepdims=True)
    return (gamma.reshape(1, -1, 1, 1) * (conv - mean)
            / jnp.sqrt(var + EPS) + beta.reshape(1, -1, 1, 1))


if __name__ == "__main__":
    # ConvBn(in_channels=4, out_channels=8, kernel_size=3, stride=1, pad=1)
    N, CIN, COUT, H, W = 2, 4, 8, 16, 16

    key = jax.random.PRNGKey(0)
    kx, kw, kg, kb = jax.random.split(key, 4)

    x = jax.random.normal(kx, (N, CIN, H, W), dtype=jnp.float32)
    # nn.Conv2d weight: (Cout, Cin, KH, KW), no bias.
    conv_w = jax.random.normal(kw, (COUT, CIN, 3, 3), dtype=jnp.float32) * 0.1
    # nn.BatchNorm2d affine params (deterministic, nontrivial).
    gamma = 1.0 + 0.1 * jax.random.normal(kg, (COUT,), dtype=jnp.float32)
    beta = 0.1 * jax.random.normal(kb, (COUT,), dtype=jnp.float32)

    out = conv_bn(x, conv_w, gamma, beta, kernel_size=3, stride=1, pad=1)
    out = jax.block_until_ready(out)

    ref = reference_conv_bn(x, conv_w, gamma, beta, stride=1, pad=1)
    assert out.shape == (N, COUT, H, W), out.shape
    assert jnp.allclose(out, ref, atol=1e-4, rtol=1e-4), (
        float(jnp.max(jnp.abs(out - ref))))

    print("KERNEL_OK")
</pallas_src>

<mosaic_0001>
module attributes {stable_mosaic.version = 11 : i64} {
  func.func @_stats_kernel(%arg0: i32, %arg1: memref<1x18x18x4xf32, #tpu.memory_space<vmem>>, %arg2: memref<8x36xf32, #tpu.memory_space<vmem>>, %arg3: memref<1x8x2xf32, #tpu.memory_space<vmem>>) attributes {dimension_semantics = [#tpu.dimension_semantics<parallel>], iteration_bounds = array<i64: 2>, scalar_prefetch = 0 : i64, scratch_operands = 0 : i64, tpu.core_type = #tpu.core_type<tc>, window_params = [{transform_indices = @transform_0, window_bounds = array<i64: 1, 18, 18, 4>}, {pipeline_mode = #tpu.pipeline_mode<synchronous>, transform_indices = @transform_1, window_bounds = array<i64: 8, 36>}, {transform_indices = @transform_2, window_bounds = array<i64: 1, 8, 2>}]} {
    %c0 = arith.constant 0 : index
    %c0_0 = arith.constant 0 : index
    %c0_1 = arith.constant 0 : index
    %c0_2 = arith.constant 0 : index
    %0 = vector.load %arg1[%c0, %c0_0, %c0_1, %c0_2] : memref<1x18x18x4xf32, #tpu.memory_space<vmem>>, vector<1x18x18x4xf32>
    %1 = vector.shape_cast %0 : vector<1x18x18x4xf32> to vector<18x18x4xf32>
    %2 = vector.extract_strided_slice %1 {offsets = [0, 0, 0], sizes = [16, 16, 4], strides = [1, 1, 1]} : vector<18x18x4xf32> to vector<16x16x4xf32>
    %3 = vector.shape_cast %2 : vector<16x16x4xf32> to vector<256x4xf32>
    %4 = vector.extract_strided_slice %1 {offsets = [0, 1, 0], sizes = [16, 16, 4], strides = [1, 1, 1]} : vector<18x18x4xf32> to vector<16x16x4xf32>
    %5 = vector.shape_cast %4 : vector<16x16x4xf32> to vector<256x4xf32>
    %6 = vector.extract_strided_slice %1 {offsets = [0, 2, 0], sizes = [16, 16, 4], strides = [1, 1, 1]} : vector<18x18x4xf32> to vector<16x16x4xf32>
    %7 = vector.shape_cast %6 : vector<16x16x4xf32> to vector<256x4xf32>
    %8 = vector.extract_strided_slice %1 {offsets = [1, 0, 0], sizes = [16, 16, 4], strides = [1, 1, 1]} : vector<18x18x4xf32> to vector<16x16x4xf32>
    %9 = vector.shape_cast %8 : vector<16x16x4xf32> to vector<256x4xf32>
    %10 = vector.extract_strided_slice %1 {offsets = [1, 1, 0], sizes = [16, 16, 4], strides = [1, 1, 1]} : vector<18x18x4xf32> to vector<16x16x4xf32>
    %11 = vector.shape_cast %10 : vector<16x16x4xf32> to vector<256x4xf32>
    %12 = vector.extract_strided_slice %1 {offsets = [1, 2, 0], sizes = [16, 16, 4], strides = [1, 1, 1]} : vector<18x18x4xf32> to vector<16x16x4xf32>
    %13 = vector.shape_cast %12 : vector<16x16x4xf32> to vector<256x4xf32>
    %14 = vector.extract_strided_slice %1 {offsets = [2, 0, 0], sizes = [16, 16, 4], strides = [1, 1, 1]} : vector<18x18x4xf32> to vector<16x16x4xf32>
    %15 = vector.shape_cast %14 : vector<16x16x4xf32> to vector<256x4xf32>
    %16 = vector.extract_strided_slice %1 {offsets = [2, 1, 0], sizes = [16, 16, 4], strides = [1, 1, 1]} : vector<18x18x4xf32> to vector<16x16x4xf32>
    %17 = vector.shape_cast %16 : vector<16x16x4xf32> to vector<256x4xf32>
    %18 = vector.extract_strided_slice %1 {offsets = [2, 2, 0], sizes = [16, 16, 4], strides = [1, 1, 1]} : vector<18x18x4xf32> to vector<16x16x4xf32>
    %19 = vector.shape_cast %18 : vector<16x16x4xf32> to vector<256x4xf32>
    %20 = tpu.concatenate %3, %5, %7, %9, %11, %13, %15, %17, %19 in 1 : vector<256x4xf32>, vector<256x4xf32>, vector<256x4xf32>, vector<256x4xf32>, vector<256x4xf32>, vector<256x4xf32>, vector<256x4xf32>, vector<256x4xf32>, vector<256x4xf32> -> vector<256x36xf32>
    %c0_3 = arith.constant 0 : index
    %c0_4 = arith.constant 0 : index
    %21 = vector.load %arg2[%c0_3, %c0_4] : memref<8x36xf32, #tpu.memory_space<vmem>>, vector<8x36xf32>
    %22 = tpu.transpose %20, [1, 0] : vector<256x36xf32> -> vector<36x256xf32>
    %cst = arith.constant dense<0.000000e+00> : vector<8x256xf32>
    %23 = tpu.matmul %21, %22, %cst {dimension_numbers = #tpu.dot_dimension_numbers<[1], [0], [0], [1], [0, 0, 1, 1], [], []>} : vector<8x36xf32>, vector<36x256xf32>, vector<8x256xf32> -> vector<8x256xf32>
    %cst_5 = arith.constant dense<0.000000e+00> : vector<8xf32>
    %24 = vector.multi_reduction <add>, %23, %cst_5 [1] : vector<8x256xf32> to vector<8xf32>
    %25 = vector.shape_cast %24 : vector<8xf32> to vector<8x1xf32>
    %26 = arith.mulf %23, %23 : vector<8x256xf32>
    %cst_6 = arith.constant dense<0.000000e+00> : vector<8xf32>
    %27 = vector.multi_reduction <add>, %26, %cst_6 [1] : vector<8x256xf32> to vector<8xf32>
    %28 = vector.shape_cast %27 : vector<8xf32> to vector<8x1xf32>
    %29 = tpu.concatenate %25, %28 in 1 : vector<8x1xf32>, vector<8x1xf32> -> vector<8x2xf32>
    %c0_7 = arith.constant 0 : index
    %c0_8 = arith.constant 0 : index
    %c0_9 = arith.constant 0 : index
    %30 = vector.load %arg3[%c0_7, %c0_8, %c0_9] : memref<1x8x2xf32, #tpu.memory_space<vmem>>, vector<1x8x2xf32>
    %31 = vector.shape_cast %30 : vector<1x8x2xf32> to vector<8x2xf32>
    %32 = vector.shape_cast %29 : vector<8x2xf32> to vector<1x8x2xf32>
    tpu.vector_store %arg3[%c0_7, %c0_8, %c0_9], %32 {strides = array<i32>} : memref<1x8x2xf32, #tpu.memory_space<vmem>>, vector<1x8x2xf32>,
    return
  }
  func.func @transform_0(%arg0: i32) -> (i32, i32, i32, i32) {
    %c0_i32 = arith.constant 0 : i32
    %c0_i32_0 = arith.constant 0 : i32
    %c0_i32_1 = arith.constant 0 : i32
    %c0_i32_2 = arith.constant 0 : i32
    return %arg0, %c0_i32, %c0_i32_0, %c0_i32_1 : i32, i32, i32, i32
  }
  func.func @transform_1(%arg0: i32) -> (i32, i32) {
    %c0_i32 = arith.constant 0 : i32
    %c0_i32_0 = arith.constant 0 : i32
    %c0_i32_1 = arith.constant 0 : i32
    return %c0_i32, %c0_i32_0 : i32, i32
  }
  func.func @transform_2(%arg0: i32) -> (i32, i32, i32) {
    %c0_i32 = arith.constant 0 : i32
    %c0_i32_0 = arith.constant 0 : i32
    %c0_i32_1 = arith.constant 0 : i32
    return %arg0, %c0_i32, %c0_i32_0 : i32, i32, i32
  }
}

module attributes {stable_mosaic.version = 11 : i64} {
  func.func @_apply_kernel(%arg0: i32, %arg1: memref<1x18x18x4xf32, #tpu.memory_space<vmem>>, %arg2: memref<8x36xf32, #tpu.memory_space<vmem>>, %arg3: memref<8x1xf32, #tpu.memory_space<vmem>>, %arg4: memref<8x1xf32, #tpu.memory_space<vmem>>, %arg5: memref<1x8x256xf32, #tpu.memory_space<vmem>>) attributes {dimension_semantics = [#tpu.dimension_semantics<parallel>], iteration_bounds = array<i64: 2>, scalar_prefetch = 0 : i64, scratch_operands = 0 : i64, tpu.core_type = #tpu.core_type<tc>, window_params = [{transform_indices = @transform_0, window_bounds = array<i64: 1, 18, 18, 4>}, {pipeline_mode = #tpu.pipeline_mode<synchronous>, transform_indices = @transform_1, window_bounds = array<i64: 8, 36>}, {pipeline_mode = #tpu.pipeline_mode<synchronous>, transform_indices = @transform_2, window_bounds = array<i64: 8, 1>}, {pipeline_mode = #tpu.pipeline_mode<synchronous>, transform_indices = @transform_3, window_bounds = array<i64: 8, 1>}, {transform_indices = @transform_4, window_bounds = array<i64: 1, 8, 256>}]} {
    %c0 = arith.constant 0 : index
    %c0_0 = arith.constant 0 : index
    %c0_1 = arith.constant 0 : index
    %c0_2 = arith.constant 0 : index
    %0 = vector.load %arg1[%c0, %c0_0, %c0_1, %c0_2] : memref<1x18x18x4xf32, #tpu.memory_space<vmem>>, vector<1x18x18x4xf32>
    %1 = vector.shape_cast %0 : vector<1x18x18x4xf32> to vector<18x18x4xf32>
    %2 = vector.extract_strided_slice %1 {offsets = [0, 0, 0], sizes = [16, 16, 4], strides = [1, 1, 1]} : vector<18x18x4xf32> to vector<16x16x4xf32>
    %3 = vector.shape_cast %2 : vector<16x16x4xf32> to vector<256x4xf32>
    %4 = vector.extract_strided_slice %1 {offsets = [0, 1, 0], sizes = [16, 16, 4], strides = [1, 1, 1]} : vector<18x18x4xf32> to vector<16x16x4xf32>
    %5 = vector.shape_cast %4 : vector<16x16x4xf32> to vector<256x4xf32>
    %6 = vector.extract_strided_slice %1 {offsets = [0, 2, 0], sizes = [16, 16, 4], strides = [1, 1, 1]} : vector<18x18x4xf32> to vector<16x16x4xf32>
    %7 = vector.shape_cast %6 : vector<16x16x4xf32> to vector<256x4xf32>
    %8 = vector.extract_strided_slice %1 {offsets = [1, 0, 0], sizes = [16, 16, 4], strides = [1, 1, 1]} : vector<18x18x4xf32> to vector<16x16x4xf32>
    %9 = vector.shape_cast %8 : vector<16x16x4xf32> to vector<256x4xf32>
    %10 = vector.extract_strided_slice %1 {offsets = [1, 1, 0], sizes = [16, 16, 4], strides = [1, 1, 1]} : vector<18x18x4xf32> to vector<16x16x4xf32>
    %11 = vector.shape_cast %10 : vector<16x16x4xf32> to vector<256x4xf32>
    %12 = vector.extract_strided_slice %1 {offsets = [1, 2, 0], sizes = [16, 16, 4], strides = [1, 1, 1]} : vector<18x18x4xf32> to vector<16x16x4xf32>
    %13 = vector.shape_cast %12 : vector<16x16x4xf32> to vector<256x4xf32>
    %14 = vector.extract_strided_slice %1 {offsets = [2, 0, 0], sizes = [16, 16, 4], strides = [1, 1, 1]} : vector<18x18x4xf32> to vector<16x16x4xf32>
    %15 = vector.shape_cast %14 : vector<16x16x4xf32> to vector<256x4xf32>
    %16 = vector.extract_strided_slice %1 {offsets = [2, 1, 0], sizes = [16, 16, 4], strides = [1, 1, 1]} : vector<18x18x4xf32> to vector<16x16x4xf32>
    %17 = vector.shape_cast %16 : vector<16x16x4xf32> to vector<256x4xf32>
    %18 = vector.extract_strided_slice %1 {offsets = [2, 2, 0], sizes = [16, 16, 4], strides = [1, 1, 1]} : vector<18x18x4xf32> to vector<16x16x4xf32>
    %19 = vector.shape_cast %18 : vector<16x16x4xf32> to vector<256x4xf32>
    %20 = tpu.concatenate %3, %5, %7, %9, %11, %13, %15, %17, %19 in 1 : vector<256x4xf32>, vector<256x4xf32>, vector<256x4xf32>, vector<256x4xf32>, vector<256x4xf32>, vector<256x4xf32>, vector<256x4xf32>, vector<256x4xf32>, vector<256x4xf32> -> vector<256x36xf32>
    %c0_3 = arith.constant 0 : index
    %c0_4 = arith.constant 0 : index
    %21 = vector.load %arg2[%c0_3, %c0_4] : memref<8x36xf32, #tpu.memory_space<vmem>>, vector<8x36xf32>
    %22 = tpu.transpose %20, [1, 0] : vector<256x36xf32> -> vector<36x256xf32>
    %cst = arith.constant dense<0.000000e+00> : vector<8x256xf32>
    %23 = tpu.matmul %21, %22, %cst {dimension_numbers = #tpu.dot_dimension_numbers<[1], [0], [0], [1], [0, 0, 1, 1], [], []>} : vector<8x36xf32>, vector<36x256xf32>, vector<8x256xf32> -> vector<8x256xf32>
    %c0_5 = arith.constant 0 : index
    %c0_6 = arith.constant 0 : index
    %24 = vector.load %arg3[%c0_5, %c0_6] : memref<8x1xf32, #tpu.memory_space<vmem>>, vector<8x1xf32>
    %25 = vector.broadcast %24 : vector<8x1xf32> to vector<8x256xf32>
    %26 = arith.mulf %23, %25 : vector<8x256xf32>
    %c0_7 = arith.constant 0 : index
    %c0_8 = arith.constant 0 : index
    %27 = vector.load %arg4[%c0_7, %c0_8] : memref<8x1xf32, #tpu.memory_space<vmem>>, vector<8x1xf32>
    %28 = vector.broadcast %27 : vector<8x1xf32> to vector<8x256xf32>
    %29 = arith.addf %26, %28 : vector<8x256xf32>
    %c0_9 = arith.constant 0 : index
    %c0_10 = arith.constant 0 : index
    %c0_11 = arith.constant 0 : index
    %30 = vector.load %arg5[%c0_9, %c0_10, %c0_11] : memref<1x8x256xf32, #tpu.memory_space<vmem>>, vector<1x8x256xf32>
    %31 = vector.shape_cast %30 : vector<1x8x256xf32> to vector<8x256xf32>
    %32 = vector.shape_cast %29 : vector<8x256xf32> to vector<1x8x256xf32>
    tpu.vector_store %arg5[%c0_9, %c0_10, %c0_11], %32 {strides = array<i32>} : memref<1x8x256xf32, #tpu.memory_space<vmem>>, vector<1x8x256xf32>,
    return
  }
  func.func @transform_0(%arg0: i32) -> (i32, i32, i32, i32) {
    %c0_i32 = arith.constant 0 : i32
    %c0_i32_0 = arith.constant 0 : i32
    %c0_i32_1 = arith.constant 0 : i32
    %c0_i32_2 = arith.constant 0 : i32
    return %arg0, %c0_i32, %c0_i32_0, %c0_i32_1 : i32, i32, i32, i32
  }
  func.func @transform_1(%arg0: i32) -> (i32, i32) {
    %c0_i32 = arith.constant 0 : i32
    %c0_i32_0 = arith.constant 0 : i32
    %c0_i32_1 = arith.constant 0 : i32
    return %c0_i32, %c0_i32_0 : i32, i32
  }
  func.func @transform_2(%arg0: i32) -> (i32, i32) {
    %c0_i32 = arith.constant 0 : i32
    %c0_i32_0 = arith.constant 0 : i32
    %c0_i32_1 = arith.constant 0 : i32
    return %c0_i32, %c0_i32_0 : i32, i32
  }
  func.func @transform_3(%arg0: i32) -> (i32, i32) {
    %c0_i32 = arith.constant 0 : i32
    %c0_i32_0 = arith.constant 0 : i32
    %c0_i32_1 = arith.constant 0 : i32
    return %c0_i32, %c0_i32_0 : i32, i32
  }
  func.func @transform_4(%arg0: i32) -> (i32, i32, i32) {
    %c0_i32 = arith.constant 0 : i32
    %c0_i32_0 = arith.constant 0 : i32
    %c0_i32_1 = arith.constant 0 : i32
    return %arg0, %c0_i32, %c0_i32_0 : i32, i32, i32
  }
}

</mosaic_0001>

<llo_original>
// kernel: conv_bn.3
$region0: #{conv_bn.3}
  #allocation0 [shape = 'u32[]', space=smem, size = 0x4, offset = 0x4, fixed_abs, tag = 'smem constant byte address 0x4 - core index']
  #allocation1 [shape = 'u32[144,128]{1,0:T(1,128)}', space=vmem, size = 0x12000, scoped, tag = 'internal scratch']
  %s0 = inlined_call_operand.vmem [shape: f32[2,18,18,4], index: 0, kind: input, shape index: {}]
  %s1 = inlined_call_operand.vmem [shape: f32[8,36], index: 1, kind: input, shape index: {}]
  %s2 = inlined_call_operand.vmem [shape: f32[8,1], index: 2, kind: input, shape index: {}]
  %s3 = inlined_call_operand.vmem [shape: f32[8,1], index: 3, kind: input, shape index: {}]
  %s4 = inlined_call_operand.vmem [shape: f32[2,8,256], index: 4, kind: output, shape index: {}]
  %s5 = sld [smem:[#allocation0]]
  $region49: #{conv_bn.3} parent=0
    _
  %s7 = ssub.s32 1, %s5
  %s8 = scalar_select 0, %s7, %s5
  loop: start=0, step=1, limit=4
  $region2: #{conv_bn.3} parent=0 // loop_pre_header
    _
  $region3: #{conv_bn.3} parent=0 // loop_header
    %s10 = sphi 0, %s14
    %p11 = scmp.ge.s32.totalorder %s10, 4
    %s20 = sphi 0, %s22
    %s23 = sphi 0, %s20
    %s24 = sphi 0, %s23
    %s40 = sphi 0, %s24
    %s44 = sphi 0, %s44
    %s46 = sphi 0, %s44
    %s47 = sphi 0, %s46
    %s61 = sphi 0, %s47
    %s65 = sphi 0, %s65
    %s67 = sphi 0, %s65
    %s68 = sphi 0, %s67
    %s82 = sphi 0, %s68
    %s86 = sphi 0, %s86
    %s88 = sphi 0, %s86
    %s89 = sphi 0, %s88
    %s103 = sphi 0, %s89
    %s109 = sphi 0, %s111
    %s112 = sphi 0, %s109
    %s113 = sphi 0, %s112
    %s129 = sphi 0, %s113
  $region4: #{conv_bn.3} parent=0 // loop_header_branch
    %13 = sbr.rel (%p11) target = $region8
  $region5: #{conv_bn.3} parent=0 // loop_body
    %s15 = ssub.s32 %s10, 1
    %s16 = ssub.s32 %s10, 2
    %s17 = sadd.s32 %s10, 1
    %s18 = ssub.s32 %s10, %s17
    %p19 = scmp.eq.s32.totalorder %s18, 0
    %s21 = sadd.s32 %s20, 1
    %s22 = scalar_select %p19, %s20, %s21
    %p25 = pneg %p19
    %p26 = scmp.eq.s32.totalorder %s10, 1
    %p27 = por %p25, %p26
    %p28 = scmp.ne.s32.totalorder %s20, %s23
    %p29 = scmp.eq.s32.totalorder %s10, 0
    %p30 = por %p28, %p29
    %p31 = scmp.ne.s32.totalorder %s20, %s23
    %p32 = scmp.eq.s32.totalorder %s15, 1
    %p33 = por %p31, %p32
    %p34 = scmp.ne.s32.totalorder %s23, %s24
    %p35 = scmp.eq.s32.totalorder %s15, 0
    %p36 = por %p34, %p35
    %p37 = scmp.ne.s32.totalorder %s23, %s24
    %p38 = scmp.eq.s32.totalorder %s16, 1
    %p39 = por %p37, %p38
    %p41 = scmp.ne.s32.totalorder %s24, %s40
    %p42 = scmp.eq.s32.totalorder %s16, 0
    %p43 = por %p41, %p42
    %s45 = sadd.s32 %s44, 1
    %p48 = scmp.eq.s32.totalorder %s10, 1
    %p49 = scmp.ne.s32.totalorder %s44, %s46
    %p50 = scmp.eq.s32.totalorder %s10, 0
    %p51 = por %p49, %p50
    %p52 = scmp.ne.s32.totalorder %s44, %s46
    %p53 = scmp.eq.s32.totalorder %s15, 1
    %p54 = por %p52, %p53
    %p55 = scmp.ne.s32.totalorder %s46, %s47
    %p56 = scmp.eq.s32.totalorder %s15, 0
    %p57 = por %p55, %p56
    %p58 = scmp.ne.s32.totalorder %s46, %s47
    %p59 = scmp.eq.s32.totalorder %s16, 1
    %p60 = por %p58, %p59
    %p62 = scmp.ne.s32.totalorder %s47, %s61
    %p63 = scmp.eq.s32.totalorder %s16, 0
    %p64 = por %p62, %p63
    %s66 = sadd.s32 %s65, 1
    %p69 = scmp.eq.s32.totalorder %s10, 1
    %p70 = scmp.ne.s32.totalorder %s65, %s67
    %p71 = scmp.eq.s32.totalorder %s10, 0
    %p72 = por %p70, %p71
    %p73 = scmp.ne.s32.totalorder %s65, %s67
    %p74 = scmp.eq.s32.totalorder %s15, 1
    %p75 = por %p73, %p74
    %p76 = scmp.ne.s32.totalorder %s67, %s68
    %p77 = scmp.eq.s32.totalorder %s15, 0
    %p78 = por %p76, %p77
    %p79 = scmp.ne.s32.totalorder %s67, %s68
    %p80 = scmp.eq.s32.totalorder %s16, 1
    %p81 = por %p79, %p80
    %p83 = scmp.ne.s32.totalorder %s68, %s82
    %p84 = scmp.eq.s32.totalorder %s16, 0
    %p85 = por %p83, %p84
    %s87 = sadd.s32 %s86, 1
    %p90 = scmp.eq.s32.totalorder %s10, 1
    %p91 = scmp.ne.s32.totalorder %s86, %s88
    %p92 = scmp.eq.s32.totalorder %s10, 0
    %p93 = por %p91, %p92
    %p94 = scmp.ne.s32.totalorder %s86, %s88
    %p95 = scmp.eq.s32.totalorder %s15, 1
    %p96 = por %p94, %p95
    %p97 = scmp.ne.s32.totalorder %s88, %s89
    %p98 = scmp.eq.s32.totalorder %s15, 0
    %p99 = por %p97, %p98
    %p100 = scmp.ne.s32.totalorder %s88, %s89
    %p101 = scmp.eq.s32.totalorder %s16, 1
    %p102 = por %p100, %p101
    %p104 = scmp.ne.s32.totalorder %s89, %s103
    %p105 = scmp.eq.s32.totalorder %s16, 0
    %p106 = por %p104, %p105
    %s107 = ssub.s32 %s10, %s17
    %p108 = scmp.eq.s32.totalorder %s107, 0
    %s110 = sadd.s32 %s109, 1
    %s111 = scalar_select %p108, %s109, %s110
    %p114 = pneg %p108
    %p115 = scmp.eq.s32.totalorder %s10, 1
    %p116 = por %p114, %p115
    %p117 = scmp.ne.s32.totalorder %s109, %s112
    %p118 = scmp.eq.s32.totalorder %s10, 0
    %p119 = por %p117, %p118
    %p120 = scmp.ne.s32.totalorder %s109, %s112
    %p121 = scmp.eq.s32.totalorder %s15, 1
    %p122 = por %p120, %p121
    %p123 = scmp.ne.s32.totalorder %s112, %s113
    %p124 = scmp.eq.s32.totalorder %s15, 0
    %p125 = por %p123, %p124
    %p126 = scmp.ne.s32.totalorder %s112, %s113
    %p127 = scmp.eq.s32.totalorder %s16, 1
    %p128 = por %p126, %p127
    %p130 = scmp.ne.s32.totalorder %s113, %s129
    %p131 = scmp.eq.s32.totalorder %s16, 0
    %p132 = por %p130, %p131
    %p133 = scmp.le.s32.totalorder 1, %s10
    %p134 = scmp.lt.s32.totalorder %s10, 3
    %p135 = pnand %p133, %p134
    %p136 = pneg %p135
    // Predicated region
    $region9: #{conv_bn.3} parent=5 // pred_check
      _
    $region10: #{conv_bn.3} parent=5 // pred_check_branch
      %138 = sbr.rel (%p135) target = $region12
    $region11: #{conv_bn.3} parent=5 // pred_region
      %s139 = ssub.s32 %s10, 1
      // Predicated region
      $region13: #{conv_bn.3} parent=11 // pred_check
        %p140 = pneg %p57
      $region14: #{conv_bn.3} parent=11 // pred_check_branch
        %142 = sbr.rel (%p140) target = $region16
      $region15: #{conv_bn.3} parent=11 // pred_region
        _
      $region16: #{conv_bn.3} parent=11 // pred_fallthru
        _
      // Predicated region
      $region17: #{conv_bn.3} parent=11 // pred_check
        %p143 = pneg %p78
      $region18: #{conv_bn.3} parent=11 // pred_check_branch
        %145 = sbr.rel (%p143) target = $region20
      $region19: #{conv_bn.3} parent=11 // pred_region
        _
      $region20: #{conv_bn.3} parent=11 // pred_fallthru
        _
      // Predicated region
      $region21: #{conv_bn.3} parent=11 // pred_check
        %p146 = pneg %p99
      $region22: #{conv_bn.3} parent=11 // pred_check_branch
        %148 = sbr.rel (%p146) target = $region24
      $region23: #{conv_bn.3} parent=11 // pred_region
        _
      $region24: #{conv_bn.3} parent=11 // pred_fallthru
        _
    $region12: #{conv_bn.3} parent=5 // pred_fallthru
      _
    %p149 = scmp.lt.s32.totalorder %s10, 2
    // Predicated region
    $region25: #{conv_bn.3} parent=5 // pred_check
      %p150 = pneg %p149
    $region26: #{conv_bn.3} parent=5 // pred_check_branch
      %152 = sbr.rel (%p150) target = $region28
    $region27: #{conv_bn.3} parent=5 // pred_region
      // Predicated region
      $region29: #{conv_bn.3} parent=27 // pred_check
        %p153 = pneg %p30
      $region30: #{conv_bn.3} parent=27 // pred_check_branch
        %155 = sbr.rel (%p153) target = $region32
      $region31: #{conv_bn.3} parent=27 // pred_region
        %p156 = scmp.lt.s32.totalorder %s10, 1
        %s157 = scalar_select %p156, %s10, 1
        %s158 = smul.addr %s157, 54
        %s159 = smul.addr %s158, 8
        %s160 = scalar_lea.vmem %s0, %s159
      $region32: #{conv_bn.3} parent=27 // pred_fallthru
        _
    $region28: #{conv_bn.3} parent=5 // pred_fallthru
      _
    %p161 = scmp.le.s32.totalorder 1, %s10
    %p162 = scmp.lt.s32.totalorder %s10, 3
    %p163 = pnand %p161, %p162
    %p164 = pneg %p163
    // Predicated region
    $region33: #{conv_bn.3} parent=5 // pred_check
      _
    $region34: #{conv_bn.3} parent=5 // pred_check_branch
      %166 = sbr.rel (%p163) target = $region36
    $region35: #{conv_bn.3} parent=5 // pred_region
      %s167 = ssub.s32 %s10, 1
      %p168 = scmp.lt.s32.totalorder %s15, 1
      %s169 = scalar_select %p168, %s15, 1
      %s170 = smul.addr %s169, 54
      %s171 = smul.addr %s170, 8
      %s172 = scalar_lea.vmem %s0, %s171
      %p173 = pneg %p36
      %p174 = pneg %p33
      %p175 = pneg %p57
      %p176 = pneg %p54
      %p177 = pneg %p78
      %p178 = pneg %p75
      %p179 = pneg %p99
      %p180 = pneg %p96
      %p181 = pneg %p125
      %p182 = pneg %p122
      %p183 = scmp.lt.s32.totalorder %s15, 1
      %s184 = scalar_select %p183, %s15, 1
      %s185 = smul.addr %s184, 2
      %s186 = smul.addr %s185, 8
      %s187 = scalar_lea.vmem %s4, %s186
      %p188 = scmp.lt.s32.totalorder %s15, 1
      %s189 = scalar_select %p188, %s15, 1
      %s190 = smul.addr %s189, 54
      %s191 = smul.addr %s190, 8
      %s192 = scalar_lea.vmem %s0, %s191
      %p193 = scmp.lt.s32.totalorder %s15, 1
      %s194 = scalar_select %p193, %s15, 1
      %s195 = smul.addr %s194, 2
      %s196 = smul.addr %s195, 8
      %s197 = scalar_lea.vmem %s4, %s196
      %v198 = vld [vmem:[%s192] sm:$0xff]
      %v199 = vld [vmem:[%s192 + $0x8] sm:$0xff]
      %v200 = vld [vmem:[%s192 + $0x10] sm:$0x3]
      %v201 = vld [vmem:[%s192 + $0x18] sm:$0xff]
      %v202 = vld [vmem:[%s192 + $0x20] sm:$0xff]
      %v203 = vld [vmem:[%s192 + $0x28] sm:$0x3]
      %v204 = vld [vmem:[%s192 + $0x30] sm:$0xff]
      %v205 = vld [vmem:[%s192 + $0x38] sm:$0xff]
      %v206 = vld [vmem:[%s192 + $0x40] sm:$0x3]
      %v207 = vld [vmem:[%s192 + $0x48] sm:$0xff]
      %v208 = vld [vmem:[%s192 + $0x50] sm:$0xff]
      %v209 = vld [vmem:[%s192 + $0x58] sm:$0x3]
      %v210 = vld [vmem:[%s192 + $0x60] sm:$0xff]
      %v211 = vld [vmem:[%s192 + $0x68] sm:$0xff]
      %v212 = vld [vmem:[%s192 + $0x70] sm:$0x3]
      %v213 = vld [vmem:[%s192 + $0x78] sm:$0xff]
      %v214 = vld [vmem:[%s192 + $0x80] sm:$0xff]
      %v215 = vld [vmem:[%s192 + $0x88] sm:$0x3]
      %v216 = vld [vmem:[%s192 + $0x90] sm:$0xff]
      %v217 = vld [vmem:[%s192 + $0x98] sm:$0xff]
      %v218 = vld [vmem:[%s192 + $0xa0] sm:$0x3]
      %v219 = vld [vmem:[%s192 + $0xa8] sm:$0xff]
      %v220 = vld [vmem:[%s192 + $0xb0] sm:$0xff]
      %v221 = vld [vmem:[%s192 + $0xb8] sm:$0x3]
      %v222 = vld [vmem:[%s192 + $0xc0] sm:$0xff]
      %v223 = vld [vmem:[%s192 + $0xc8] sm:$0xff]
      %v224 = vld [vmem:[%s192 + $0xd0] sm:$0x3]
      %v225 = vld [vmem:[%s192 + $0xd8] sm:$0xff]
      %v226 = vld [vmem:[%s192 + $0xe0] sm:$0xff]
      %v227 = vld [vmem:[%s192 + $0xe8] sm:$0x3]
      %v228 = vld [vmem:[%s192 + $0xf0] sm:$0xff]
      %v229 = vld [vmem:[%s192 + $0xf8] sm:$0xff]
      %v230 = vld [vmem:[%s192 + $0x100] sm:$0x3]
      %v231 = vld [vmem:[%s192 + $0x108] sm:$0xff]
      %v232 = vld [vmem:[%s192 + $0x110] sm:$0xff]
      %v233 = vld [vmem:[%s192 + $0x118] sm:$0x3]
      %v234 = vld [vmem:[%s192 + $0x120] sm:$0xff]
      %v235 = vld [vmem:[%s192 + $0x128] sm:$0xff]
      %v236 = vld [vmem:[%s192 + $0x130] sm:$0x3]
      %v237 = vld [vmem:[%s192 + $0x138] sm:$0xff]
      %v238 = vld [vmem:[%s192 + $0x140] sm:$0xff]
      %v239 = vld [vmem:[%s192 + $0x148] sm:$0x3]
      %v240 = vld [vmem:[%s192 + $0x150] sm:$0xff]
      %v241 = vld [vmem:[%s192 + $0x158] sm:$0xff]
      %v242 = vld [vmem:[%s192 + $0x160] sm:$0x3]
      %v243 = vld [vmem:[%s192 + $0x168] sm:$0xff]
      %v244 = vld [vmem:[%s192 + $0x170] sm:$0xff]
      %v245 = vld [vmem:[%s192 + $0x178] sm:$0x3]
      %v246 = vld [vmem:[%s192 + $0x180] sm:$0xff]
      %v247 = vld [vmem:[%s192 + $0x188] sm:$0xff]
      %v248 = vld [vmem:[%s192 + $0x190] sm:$0x3]
      %v249 = vld [vmem:[%s192 + $0x198] sm:$0xff]
      %v250 = vld [vmem:[%s192 + $0x1a0] sm:$0xff]
      %v251 = vld [vmem:[%s192 + $0x1a8] sm:$0x3]
      %vm300 = vcmask 1046528
      %v301 = vrot.slane %v198, 1
      %v302 = vrot.slane %v199, 1
      %v303 = vsel %vm300, %v301, %v302
      %v304 = vrot.slane %v200, 1
      %v305 = vsel %vm300, %v302, %v304
      %v306 = vrot.slane %v201, 1
      %v307 = vrot.slane %v202, 1
      %v308 = vsel %vm300, %v306, %v307
      %v309 = vrot.slane %v203, 1
      %v310 = vsel %vm300, %v307, %v309
      %v311 = vrot.slane %v204, 1
      %v312 = vrot.slane %v205, 1
      %v313 = vsel %vm300, %v311, %v312
      %v314 = vrot.slane %v206, 1
      %v315 = vsel %vm300, %v312, %v314
      %v316 = vrot.slane %v207, 1
      %v317 = vrot.slane %v208, 1
      %v318 = vsel %vm300, %v316, %v317
      %v319 = vrot.slane %v209, 1
      %v320 = vsel %vm300, %v317, %v319
      %v321 = vrot.slane %v210, 1
      %v322 = vrot.slane %v211, 1
      %v323 = vsel %vm300, %v321, %v322
      %v324 = vrot.slane %v212, 1
      %v325 = vsel %vm300, %v322, %v324
      %v326 = vrot.slane %v213, 1
      %v327 = vrot.slane %v214, 1
      %v328 = vsel %vm300, %v326, %v327
      %v329 = vrot.slane %v215, 1
      %v330 = vsel %vm300, %v327, %v329
      %v331 = vrot.slane %v216, 1
      %v332 = vrot.slane %v217, 1
      %v333 = vsel %vm300, %v331, %v332
      %v334 = vrot.slane %v218, 1
      %v335 = vsel %vm300, %v332, %v334
      %v336 = vrot.slane %v219, 1
      %v337 = vrot.slane %v220, 1
      %v338 = vsel %vm300, %v336, %v337
      %v339 = vrot.slane %v221, 1
      %v340 = vsel %vm300, %v337, %v339
      %v341 = vrot.slane %v222, 1
      %v342 = vrot.slane %v223, 1
      %v343 = vsel %vm300, %v341, %v342
      %v344 = vrot.slane %v224, 1
      %v345 = vsel %vm300, %v342, %v344
      %v346 = vrot.slane %v225, 1
      %v347 = vrot.slane %v226, 1
      %v348 = vsel %vm300, %v346, %v347
      %v349 = vrot.slane %v227, 1
      %v350 = vsel %vm300, %v347, %v349
      %v351 = vrot.slane %v228, 1
      %v352 = vrot.slane %v229, 1
      %v353 = vsel %vm300, %v351, %v352
      %v354 = vrot.slane %v230, 1
      %v355 = vsel %vm300, %v352, %v354
      %v356 = vrot.slane %v231, 1
      %v357 = vrot.slane %v232, 1
      %v358 = vsel %vm300, %v356, %v357
      %v359 = vrot.slane %v233, 1
      %v360 = vsel %vm300, %v357, %v359
      %v361 = vrot.slane %v234, 1
      %v362 = vrot.slane %v235, 1
      %v363 = vsel %vm300, %v361, %v362
      %v364 = vrot.slane %v236, 1
      %v365 = vsel %vm300, %v362, %v364
      %v366 = vrot.slane %v237, 1
      %v367 = vrot.slane %v238, 1
      %v368 = vsel %vm300, %v366, %v367
      %v369 = vrot.slane %v239, 1
      %v370 = vsel %vm300, %v367, %v369
      %v371 = vrot.slane %v240, 1
      %v372 = vrot.slane %v241, 1
      %v373 = vsel %vm300, %v371, %v372
      %v374 = vrot.slane %v242, 1
      %v375 = vsel %vm300, %v372, %v374
      %v376 = vrot.slane %v243, 1
      %v377 = vrot.slane %v244, 1
      %v378 = vsel %vm300, %v376, %v377
      %v379 = vrot.slane %v245, 1
      %v380 = vsel %vm300, %v377, %v379
      %vm381 = vcmask 1045504
      %v382 = vrot.slane %v198, 2
      %v383 = vrot.slane %v199, 2
      %v384 = vsel %vm381, %v382, %v383
      %v385 = vrot.slane %v200, 2
      %v386 = vsel %vm381, %v383, %v385
      %v387 = vrot.slane %v201, 2
      %v388 = vrot.slane %v202, 2
      %v389 = vsel %vm381, %v387, %v388
      %v390 = vrot.slane %v203, 2
      %v391 = vsel %vm381, %v388, %v390
      %v392 = vrot.slane %v204, 2
      %v393 = vrot.slane %v205, 2
      %v394 = vsel %vm381, %v392, %v393
      %v395 = vrot.slane %v206, 2
      %v396 = vsel %vm381, %v393, %v395
      %v397 = vrot.slane %v207, 2
      %v398 = vrot.slane %v208, 2
      %v399 = vsel %vm381, %v397, %v398
      %v400 = vrot.slane %v209, 2
      %v401 = vsel %vm381, %v398, %v400
      %v402 = vrot.slane %v210, 2
      %v403 = vrot.slane %v211, 2
      %v404 = vsel %vm381, %v402, %v403
      %v405 = vrot.slane %v212, 2
      %v406 = vsel %vm381, %v403, %v405
      %v407 = vrot.slane %v213, 2
      %v408 = vrot.slane %v214, 2
      %v409 = vsel %vm381, %v407, %v408
      %v410 = vrot.slane %v215, 2
      %v411 = vsel %vm381, %v408, %v410
      %v412 = vrot.slane %v216, 2
      %v413 = vrot.slane %v217, 2
      %v414 = vsel %vm381, %v412, %v413
      %v415 = vrot.slane %v218, 2
      %v416 = vsel %vm381, %v413, %v415
      %v417 = vrot.slane %v219, 2
      %v418 = vrot.slane %v220, 2
      %v419 = vsel %vm381, %v417, %v418
      %v420 = vrot.slane %v221, 2
      %v421 = vsel %vm381, %v418, %v420
      %v422 = vrot.slane %v222, 2
      %v423 = vrot.slane %v223, 2
      %v424 = vsel %vm381, %v422, %v423
      %v425 = vrot.slane %v224, 2
      %v426 = vsel %vm381, %v423, %v425
      %v427 = vrot.slane %v225, 2
      %v428 = vrot.slane %v226, 2
      %v429 = vsel %vm381, %v427, %v428
      %v430 = vrot.slane %v227, 2
      %v431 = vsel %vm381, %v428, %v430
      %v432 = vrot.slane %v228, 2
      %v433 = vrot.slane %v229, 2
      %v434 = vsel %vm381, %v432, %v433
      %v435 = vrot.slane %v230, 2
      %v436 = vsel %vm381, %v433, %v435
      %v437 = vrot.slane %v231, 2
      %v438 = vrot.slane %v232, 2
      %v439 = vsel %vm381, %v437, %v438
      %v440 = vrot.slane %v233, 2
      %v441 = vsel %vm381, %v438, %v440
      %v442 = vrot.slane %v234, 2
      %v443 = vrot.slane %v235, 2
      %v444 = vsel %vm381, %v442, %v443
      %v445 = vrot.slane %v236, 2
      %v446 = vsel %vm381, %v443, %v445
      %v447 = vrot.slane %v237, 2
      %v448 = vrot.slane %v238, 2
      %v449 = vsel %vm381, %v447, %v448
      %v450 = vrot.slane %v239, 2
      %v451 = vsel %vm381, %v448, %v450
      %v452 = vrot.slane %v240, 2
      %v453 = vrot.slane %v241, 2
      %v454 = vsel %vm381, %v452, %v453
      %v455 = vrot.slane %v242, 2
      %v456 = vsel %vm381, %v453, %v455
      %v457 = vrot.slane %v243, 2
      %v458 = vrot.slane %v244, 2
      %v459 = vsel %vm381, %v457, %v458
      %v460 = vrot.slane %v245, 2
      %v461 = vsel %vm381, %v458, %v460
      %v465 = vrot.slane %v246, 1
      %v466 = vrot.slane %v247, 1
      %v467 = vsel %vm300, %v465, %v466
      %v468 = vrot.slane %v248, 1
      %v469 = vsel %vm300, %v466, %v468
      %v470 = vrot.slane %v246, 2
      %v471 = vrot.slane %v247, 2
      %v472 = vsel %vm381, %v470, %v471
      %v473 = vrot.slane %v248, 2
      %v474 = vsel %vm381, %v471, %v473
      %v478 = vrot.slane %v249, 1
      %v479 = vrot.slane %v250, 1
      %v480 = vsel %vm300, %v478, %v479
      %v481 = vrot.slane %v251, 1
      %v482 = vsel %vm300, %v479, %v481
      %v483 = vrot.slane %v249, 2
      %v484 = vrot.slane %v250, 2
      %v485 = vsel %vm381, %v483, %v484
      %v486 = vrot.slane %v251, 2
      %v487 = vsel %vm381, %v484, %v486
      %488 = vrot.lane.b32.xlu0 %v303, 4
      %v489 = vpop.permute.xlu0 %488
      %490 = vrot.lane.b32.xlu0 %v305, 4
      %v491 = vpop.permute.xlu0 %490
      %492 = vrot.lane.b32.xlu0 %v308, 4
      %v493 = vpop.permute.xlu0 %492
      %494 = vrot.lane.b32.xlu0 %v310, 4
      %v495 = vpop.permute.xlu0 %494
      %496 = vrot.lane.b32.xlu0 %v313, 4
      %v497 = vpop.permute.xlu0 %496
      %498 = vrot.lane.b32.xlu0 %v315, 4
      %v499 = vpop.permute.xlu0 %498
      %500 = vrot.lane.b32.xlu0 %v318, 4
      %v501 = vpop.permute.xlu0 %500
      %502 = vrot.lane.b32.xlu0 %v320, 4
      %v503 = vpop.permute.xlu0 %502
      %504 = vrot.lane.b32.xlu0 %v323, 4
      %v505 = vpop.permute.xlu0 %504
      %506 = vrot.lane.b32.xlu0 %v325, 4
      %v507 = vpop.permute.xlu0 %506
      %508 = vrot.lane.b32.xlu0 %v328, 4
      %v509 = vpop.permute.xlu0 %508
      %510 = vrot.lane.b32.xlu0 %v330, 4
      %v511 = vpop.permute.xlu0 %510
      %512 = vrot.lane.b32.xlu0 %v333, 4
      %v513 = vpop.permute.xlu0 %512
      %514 = vrot.lane.b32.xlu0 %v335, 4
      %v515 = vpop.permute.xlu0 %514
      %516 = vrot.lane.b32.xlu0 %v338, 4
      %v517 = vpop.permute.xlu0 %516
      %518 = vrot.lane.b32.xlu0 %v340, 4
      %v519 = vpop.permute.xlu0 %518
      %520 = vrot.lane.b32.xlu0 %v343, 4
      %v521 = vpop.permute.xlu0 %520
      %522 = vrot.lane.b32.xlu0 %v345, 4
      %v523 = vpop.permute.xlu0 %522
      %524 = vrot.lane.b32.xlu0 %v348, 4
      %v525 = vpop.permute.xlu0 %524
      %526 = vrot.lane.b32.xlu0 %v350, 4
      %v527 = vpop.permute.xlu0 %526
      %528 = vrot.lane.b32.xlu0 %v353, 4
      %v529 = vpop.permute.xlu0 %528
      %530 = vrot.lane.b32.xlu0 %v355, 4
      %v531 = vpop.permute.xlu0 %530
      %532 = vrot.lane.b32.xlu0 %v358, 4
      %v533 = vpop.permute.xlu0 %532
      %534 = vrot.lane.b32.xlu0 %v360, 4
      %v535 = vpop.permute.xlu0 %534
      %536 = vrot.lane.b32.xlu0 %v363, 4
      %v537 = vpop.permute.xlu0 %536
      %538 = vrot.lane.b32.xlu0 %v365, 4
      %v539 = vpop.permute.xlu0 %538
      %540 = vrot.lane.b32.xlu0 %v368, 4
      %v541 = vpop.permute.xlu0 %540
      %542 = vrot.lane.b32.xlu0 %v370, 4
      %v543 = vpop.permute.xlu0 %542
      %544 = vrot.lane.b32.xlu0 %v373, 4
      %v545 = vpop.permute.xlu0 %544
      %546 = vrot.lane.b32.xlu0 %v375, 4
      %v547 = vpop.permute.xlu0 %546
      %548 = vrot.lane.b32.xlu0 %v378, 4
      %v549 = vpop.permute.xlu0 %548
      %550 = vrot.lane.b32.xlu0 %v380, 4
      %v551 = vpop.permute.xlu0 %550
      %584 = vrot.lane.b32.xlu0 %v384, 8
      %v585 = vpop.permute.xlu0 %584
      %586 = vrot.lane.b32.xlu0 %v386, 8
      %v587 = vpop.permute.xlu0 %586
      %588 = vrot.lane.b32.xlu0 %v389, 8
      %v589 = vpop.permute.xlu0 %588
      %590 = vrot.lane.b32.xlu0 %v391, 8
      %v591 = vpop.permute.xlu0 %590
      %592 = vrot.lane.b32.xlu0 %v394, 8
      %v593 = vpop.permute.xlu0 %592
      %594 = vrot.lane.b32.xlu0 %v396, 8
      %v595 = vpop.permute.xlu0 %594
      %596 = vrot.lane.b32.xlu0 %v399, 8
      %v597 = vpop.permute.xlu0 %596
      %598 = vrot.lane.b32.xlu0 %v401, 8
      %v599 = vpop.permute.xlu0 %598
      %600 = vrot.lane.b32.xlu0 %v404, 8
      %v601 = vpop.permute.xlu0 %600
      %602 = vrot.lane.b32.xlu0 %v406, 8
      %v603 = vpop.permute.xlu0 %602
      %604 = vrot.lane.b32.xlu0 %v409, 8
      %v605 = vpop.permute.xlu0 %604
      %606 = vrot.lane.b32.xlu0 %v411, 8
      %v607 = vpop.permute.xlu0 %606
      %608 = vrot.lane.b32.xlu0 %v414, 8
      %v609 = vpop.permute.xlu0 %608
      %610 = vrot.lane.b32.xlu0 %v416, 8
      %v611 = vpop.permute.xlu0 %610
      %612 = vrot.lane.b32.xlu0 %v419, 8
      %v613 = vpop.permute.xlu0 %612
      %614 = vrot.lane.b32.xlu0 %v421, 8
      %v615 = vpop.permute.xlu0 %614
      %616 = vrot.lane.b32.xlu0 %v424, 8
      %v617 = vpop.permute.xlu0 %616
      %618 = vrot.lane.b32.xlu0 %v426, 8
      %v619 = vpop.permute.xlu0 %618
      %620 = vrot.lane.b32.xlu0 %v429, 8
      %v621 = vpop.permute.xlu0 %620
      %622 = vrot.lane.b32.xlu0 %v431, 8
      %v623 = vpop.permute.xlu0 %622
      %624 = vrot.lane.b32.xlu0 %v434, 8
      %v625 = vpop.permute.xlu0 %624
      %626 = vrot.lane.b32.xlu0 %v436, 8
      %v627 = vpop.permute.xlu0 %626
      %628 = vrot.lane.b32.xlu0 %v439, 8
      %v629 = vpop.permute.xlu0 %628
      %630 = vrot.lane.b32.xlu0 %v441, 8
      %v631 = vpop.permute.xlu0 %630
      %632 = vrot.lane.b32.xlu0 %v444, 8
      %v633 = vpop.permute.xlu0 %632
      %634 = vrot.lane.b32.xlu0 %v446, 8
      %v635 = vpop.permute.xlu0 %634
      %636 = vrot.lane.b32.xlu0 %v449, 8
      %v637 = vpop.permute.xlu0 %636
      %638 = vrot.lane.b32.xlu0 %v451, 8
      %v639 = vpop.permute.xlu0 %638
      %640 = vrot.lane.b32.xlu0 %v454, 8
      %v641 = vpop.permute.xlu0 %640
      %642 = vrot.lane.b32.xlu0 %v456, 8
      %v643 = vpop.permute.xlu0 %642
      %644 = vrot.lane.b32.xlu0 %v459, 8
      %v645 = vpop.permute.xlu0 %644
      %646 = vrot.lane.b32.xlu0 %v461, 8
      %v647 = vpop.permute.xlu0 %646
      %680 = vrot.lane.b32.xlu0 %v201, 12
      %v681 = vpop.permute.xlu0 %680
      %682 = vrot.lane.b32.xlu0 %v202, 12
      %v683 = vpop.permute.xlu0 %682
      %684 = vrot.lane.b32.xlu0 %v204, 12
      %v685 = vpop.permute.xlu0 %684
      %686 = vrot.lane.b32.xlu0 %v205, 12
      %v687 = vpop.permute.xlu0 %686
      %688 = vrot.lane.b32.xlu0 %v207, 12
      %v689 = vpop.permute.xlu0 %688
      %690 = vrot.lane.b32.xlu0 %v208, 12
      %v691 = vpop.permute.xlu0 %690
      %692 = vrot.lane.b32.xlu0 %v210, 12
      %v693 = vpop.permute.xlu0 %692
      %694 = vrot.lane.b32.xlu0 %v211, 12
      %v695 = vpop.permute.xlu0 %694
      %696 = vrot.lane.b32.xlu0 %v213, 12
      %v697 = vpop.permute.xlu0 %696
      %698 = vrot.lane.b32.xlu0 %v214, 12
      %v699 = vpop.permute.xlu0 %698
      %700 = vrot.lane.b32.xlu0 %v216, 12
      %v701 = vpop.permute.xlu0 %700
      %702 = vrot.lane.b32.xlu0 %v217, 12
      %v703 = vpop.permute.xlu0 %702
      %704 = vrot.lane.b32.xlu0 %v219, 12
      %v705 = vpop.permute.xlu0 %704
      %706 = vrot.lane.b32.xlu0 %v220, 12
      %v707 = vpop.permute.xlu0 %706
      %708 = vrot.lane.b32.xlu0 %v222, 12
      %v709 = vpop.permute.xlu0 %708
      %710 = vrot.lane.b32.xlu0 %v223, 12
      %v711 = vpop.permute.xlu0 %710
      %712 = vrot.lane.b32.xlu0 %v225, 12
      %v713 = vpop.permute.xlu0 %712
      %714 = vrot.lane.b32.xlu0 %v226, 12
      %v715 = vpop.permute.xlu0 %714
      %716 = vrot.lane.b32.xlu0 %v228, 12
      %v717 = vpop.permute.xlu0 %716
      %718 = vrot.lane.b32.xlu0 %v229, 12
      %v719 = vpop.permute.xlu0 %718
      %720 = vrot.lane.b32.xlu0 %v231, 12
      %v721 = vpop.permute.xlu0 %720
      %722 = vrot.lane.b32.xlu0 %v232, 12
      %v723 = vpop.permute.xlu0 %722
      %724 = vrot.lane.b32.xlu0 %v234, 12
      %v725 = vpop.permute.xlu0 %724
      %726 = vrot.lane.b32.xlu0 %v235, 12
      %v727 = vpop.permute.xlu0 %726
      %728 = vrot.lane.b32.xlu0 %v237, 12
      %v729 = vpop.permute.xlu0 %728
      %730 = vrot.lane.b32.xlu0 %v238, 12
      %v731 = vpop.permute.xlu0 %730
      %732 = vrot.lane.b32.xlu0 %v240, 12
      %v733 = vpop.permute.xlu0 %732
      %734 = vrot.lane.b32.xlu0 %v241, 12
      %v735 = vpop.permute.xlu0 %734
      %736 = vrot.lane.b32.xlu0 %v243, 12
      %v737 = vpop.permute.xlu0 %736
      %738 = vrot.lane.b32.xlu0 %v244, 12
      %v739 = vpop.permute.xlu0 %738
      %740 = vrot.lane.b32.xlu0 %v246, 12
      %v741 = vpop.permute.xlu0 %740
      %742 = vrot.lane.b32.xlu0 %v247, 12
      %v743 = vpop.permute.xlu0 %742
      %776 = vrot.lane.b32.xlu0 %v308, 16
      %v777 = vpop.permute.xlu0 %776
      %778 = vrot.lane.b32.xlu0 %v310, 16
      %v779 = vpop.permute.xlu0 %778
      %780 = vrot.lane.b32.xlu0 %v313, 16
      %v781 = vpop.permute.xlu0 %780
      %782 = vrot.lane.b32.xlu0 %v315, 16
      %v783 = vpop.permute.xlu0 %782
      %784 = vrot.lane.b32.xlu0 %v318, 16
      %v785 = vpop.permute.xlu0 %784
      %786 = vrot.lane.b32.xlu0 %v320, 16
      %v787 = vpop.permute.xlu0 %786
      %788 = vrot.lane.b32.xlu0 %v323, 16
      %v789 = vpop.permute.xlu0 %788
      %790 = vrot.lane.b32.xlu0 %v325, 16
      %v791 = vpop.permute.xlu0 %790
      %792 = vrot.lane.b32.xlu0 %v328, 16
      %v793 = vpop.permute.xlu0 %792
      %794 = vrot.lane.b32.xlu0 %v330, 16
      %v795 = vpop.permute.xlu0 %794
      %796 = vrot.lane.b32.xlu0 %v333, 16
      %v797 = vpop.permute.xlu0 %796
      %798 = vrot.lane.b32.xlu0 %v335, 16
      %v799 = vpop.permute.xlu0 %798
      %800 = vrot.lane.b32.xlu0 %v338, 16
      %v801 = vpop.permute.xlu0 %800
      %802 = vrot.lane.b32.xlu0 %v340, 16
      %v803 = vpop.permute.xlu0 %802
      %804 = vrot.lane.b32.xlu0 %v343, 16
      %v805 = vpop.permute.xlu0 %804
      %806 = vrot.lane.b32.xlu0 %v345, 16
      %v807 = vpop.permute.xlu0 %806
      %808 = vrot.lane.b32.xlu0 %v348, 16
      %v809 = vpop.permute.xlu0 %808
      %810 = vrot.lane.b32.xlu0 %v350, 16
      %v811 = vpop.permute.xlu0 %810
      %812 = vrot.lane.b32.xlu0 %v353, 16
      %v813 = vpop.permute.xlu0 %812
      %814 = vrot.lane.b32.xlu0 %v355, 16
      %v815 = vpop.permute.xlu0 %814
      %816 = vrot.lane.b32.xlu0 %v358, 16
      %v817 = vpop.permute.xlu0 %816
      %818 = vrot.lane.b32.xlu0 %v360, 16
      %v819 = vpop.permute.xlu0 %818
      %820 = vrot.lane.b32.xlu0 %v363, 16
      %v821 = vpop.permute.xlu0 %820
      %822 = vrot.lane.b32.xlu0 %v365, 16
      %v823 = vpop.permute.xlu0 %822
      %824 = vrot.lane.b32.xlu0 %v368, 16
      %v825 = vpop.permute.xlu0 %824
      %826 = vrot.lane.b32.xlu0 %v370, 16
      %v827 = vpop.permute.xlu0 %826
      %828 = vrot.lane.b32.xlu0 %v373, 16
      %v829 = vpop.permute.xlu0 %828
      %830 = vrot.lane.b32.xlu0 %v375, 16
      %v831 = vpop.permute.xlu0 %830
      %832 = vrot.lane.b32.xlu0 %v378, 16
      %v833 = vpop.permute.xlu0 %832
      %834 = vrot.lane.b32.xlu0 %v380, 16
      %v835 = vpop.permute.xlu0 %834
      %836 = vrot.lane.b32.xlu0 %v467, 16
      %v837 = vpop.permute.xlu0 %836
      %838 = vrot.lane.b32.xlu0 %v469, 16
      %v839 = vpop.permute.xlu0 %838
      %872 = vrot.lane.b32.xlu0 %v389, 20
      %v873 = vpop.permute.xlu0 %872
      %874 = vrot.lane.b32.xlu0 %v391, 20
      %v875 = vpop.permute.xlu0 %874
      %876 = vrot.lane.b32.xlu0 %v394, 20
      %v877 = vpop.permute.xlu0 %876
      %878 = vrot.lane.b32.xlu0 %v396, 20
      %v879 = vpop.permute.xlu0 %878
      %880 = vrot.lane.b32.xlu0 %v399, 20
      %v881 = vpop.permute.xlu0 %880
      %882 = vrot.lane.b32.xlu0 %v401, 20
      %v883 = vpop.permute.xlu0 %882
      %884 = vrot.lane.b32.xlu0 %v404, 20
      %v885 = vpop.permute.xlu0 %884
      %886 = vrot.lane.b32.xlu0 %v406, 20
      %v887 = vpop.permute.xlu0 %886
      %888 = vrot.lane.b32.xlu0 %v409, 20
      %v889 = vpop.permute.xlu0 %888
      %890 = vrot.lane.b32.xlu0 %v411, 20
      %v891 = vpop.permute.xlu0 %890
      %892 = vrot.lane.b32.xlu0 %v414, 20
      %v893 = vpop.permute.xlu0 %892
      %894 = vrot.lane.b32.xlu0 %v416, 20
      %v895 = vpop.permute.xlu0 %894
      %896 = vrot.lane.b32.xlu0 %v419, 20
      %v897 = vpop.permute.xlu0 %896
      %898 = vrot.lane.b32.xlu0 %v421, 20
      %v899 = vpop.permute.xlu0 %898
      %900 = vrot.lane.b32.xlu0 %v424, 20
      %v901 = vpop.permute.xlu0 %900
      %902 = vrot.lane.b32.xlu0 %v426, 20
      %v903 = vpop.permute.xlu0 %902
      %904 = vrot.lane.b32.xlu0 %v429, 20
      %v905 = vpop.permute.xlu0 %904
      %906 = vrot.lane.b32.xlu0 %v431, 20
      %v907 = vpop.permute.xlu0 %906
      %908 = vrot.lane.b32.xlu0 %v434, 20
      %v909 = vpop.permute.xlu0 %908
      %910 = vrot.lane.b32.xlu0 %v436, 20
      %v911 = vpop.permute.xlu0 %910
      %912 = vrot.lane.b32.xlu0 %v439, 20
      %v913 = vpop.permute.xlu0 %912
      %914 = vrot.lane.b32.xlu0 %v441, 20
      %v915 = vpop.permute.xlu0 %914
      %916 = vrot.lane.b32.xlu0 %v444, 20
      %v917 = vpop.permute.xlu0 %916
      %918 = vrot.lane.b32.xlu0 %v446, 20
      %v919 = vpop.permute.xlu0 %918
      %920 = vrot.lane.b32.xlu0 %v449, 20
      %v921 = vpop.permute.xlu0 %920
      %922 = vrot.lane.b32.xlu0 %v451, 20
      %v923 = vpop.permute.xlu0 %922
      %924 = vrot.lane.b32.xlu0 %v454, 20
      %v925 = vpop.permute.xlu0 %924
      %926 = vrot.lane.b32.xlu0 %v456, 20
      %v927 = vpop.permute.xlu0 %926
      %928 = vrot.lane.b32.xlu0 %v459, 20
      %v929 = vpop.permute.xlu0 %928
      %930 = vrot.lane.b32.xlu0 %v461, 20
      %v931 = vpop.permute.xlu0 %930
      %932 = vrot.lane.b32.xlu0 %v472, 20
      %v933 = vpop.permute.xlu0 %932
      %934 = vrot.lane.b32.xlu0 %v474, 20
      %v935 = vpop.permute.xlu0 %934
      %968 = vrot.lane.b32.xlu0 %v204, 24
      %v969 = vpop.permute.xlu0 %968
      %970 = vrot.lane.b32.xlu0 %v205, 24
      %v971 = vpop.permute.xlu0 %970
      %972 = vrot.lane.b32.xlu0 %v207, 24
      %v973 = vpop.permute.xlu0 %972
      %974 = vrot.lane.b32.xlu0 %v208, 24
      %v975 = vpop.permute.xlu0 %974
      %976 = vrot.lane.b32.xlu0 %v210, 24
      %v977 = vpop.permute.xlu0 %976
      %978 = vrot.lane.b32.xlu0 %v211, 24
      %v979 = vpop.permute.xlu0 %978
      %980 = vrot.lane.b32.xlu0 %v213, 24
      %v981 = vpop.permute.xlu0 %980
      %982 = vrot.lane.b32.xlu0 %v214, 24
      %v983 = vpop.permute.xlu0 %982
      %984 = vrot.lane.b32.xlu0 %v216, 24
      %v985 = vpop.permute.xlu0 %984
      %986 = vrot.lane.b32.xlu0 %v217, 24
      %v987 = vpop.permute.xlu0 %986
      %988 = vrot.lane.b32.xlu0 %v219, 24
      %v989 = vpop.permute.xlu0 %988
      %990 = vrot.lane.b32.xlu0 %v220, 24
      %v991 = vpop.permute.xlu0 %990
      %992 = vrot.lane.b32.xlu0 %v222, 24
      %v993 = vpop.permute.xlu0 %992
      %994 = vrot.lane.b32.xlu0 %v223, 24
      %v995 = vpop.permute.xlu0 %994
      %996 = vrot.lane.b32.xlu0 %v225, 24
      %v997 = vpop.permute.xlu0 %996
      %998 = vrot.lane.b32.xlu0 %v226, 24
      %v999 = vpop.permute.xlu0 %998
      %1000 = vrot.lane.b32.xlu0 %v228, 24
      %v1001 = vpop.permute.xlu0 %1000
      %1002 = vrot.lane.b32.xlu0 %v229, 24
      %v1003 = vpop.permute.xlu0 %1002
      %1004 = vrot.lane.b32.xlu0 %v231, 24
      %v1005 = vpop.permute.xlu0 %1004
      %1006 = vrot.lane.b32.xlu0 %v232, 24
      %v1007 = vpop.permute.xlu0 %1006
      %1008 = vrot.lane.b32.xlu0 %v234, 24
      %v1009 = vpop.permute.xlu0 %1008
      %1010 = vrot.lane.b32.xlu0 %v235, 24
      %v1011 = vpop.permute.xlu0 %1010
      %1012 = vrot.lane.b32.xlu0 %v237, 24
      %v1013 = vpop.permute.xlu0 %1012
      %1014 = vrot.lane.b32.xlu0 %v238, 24
      %v1015 = vpop.permute.xlu0 %1014
      %1016 = vrot.lane.b32.xlu0 %v240, 24
      %v1017 = vpop.permute.xlu0 %1016
      %1018 = vrot.lane.b32.xlu0 %v241, 24
      %v1019 = vpop.permute.xlu0 %1018
      %1020 = vrot.lane.b32.xlu0 %v243, 24
      %v1021 = vpop.permute.xlu0 %1020
      %1022 = vrot.lane.b32.xlu0 %v244, 24
      %v1023 = vpop.permute.xlu0 %1022
      %1024 = vrot.lane.b32.xlu0 %v246, 24
      %v1025 = vpop.permute.xlu0 %1024
      %1026 = vrot.lane.b32.xlu0 %v247, 24
      %v1027 = vpop.permute.xlu0 %1026
      %1028 = vrot.lane.b32.xlu0 %v249, 24
      %v1029 = vpop.permute.xlu0 %1028
      %1030 = vrot.lane.b32.xlu0 %v250, 24
      %v1031 = vpop.permute.xlu0 %1030
      %1064 = vrot.lane.b32.xlu0 %v313, 28
      %v1065 = vpop.permute.xlu0 %1064
      %1066 = vrot.lane.b32.xlu0 %v315, 28
      %v1067 = vpop.permute.xlu0 %1066
      %1068 = vrot.lane.b32.xlu0 %v318, 28
      %v1069 = vpop.permute.xlu0 %1068
      %1070 = vrot.lane.b32.xlu0 %v320, 28
      %v1071 = vpop.permute.xlu0 %1070
      %1072 = vrot.lane.b32.xlu0 %v323, 28
      %v1073 = vpop.permute.xlu0 %1072
      %1074 = vrot.lane.b32.xlu0 %v325, 28
      %v1075 = vpop.permute.xlu0 %1074
      %1076 = vrot.lane.b32.xlu0 %v328, 28
      %v1077 = vpop.permute.xlu0 %1076
      %1078 = vrot.lane.b32.xlu0 %v330, 28
      %v1079 = vpop.permute.xlu0 %1078
      %1080 = vrot.lane.b32.xlu0 %v333, 28
      %v1081 = vpop.permute.xlu0 %1080
      %1082 = vrot.lane.b32.xlu0 %v335, 28
      %v1083 = vpop.permute.xlu0 %1082
      %1084 = vrot.lane.b32.xlu0 %v338, 28
      %v1085 = vpop.permute.xlu0 %1084
      %1086 = vrot.lane.b32.xlu0 %v340, 28
      %v1087 = vpop.permute.xlu0 %1086
      %1088 = vrot.lane.b32.xlu0 %v343, 28
      %v1089 = vpop.permute.xlu0 %1088
      %1090 = vrot.lane.b32.xlu0 %v345, 28
      %v1091 = vpop.permute.xlu0 %1090
      %1092 = vrot.lane.b32.xlu0 %v348, 28
      %v1093 = vpop.permute.xlu0 %1092
      %1094 = vrot.lane.b32.xlu0 %v350, 28
      %v1095 = vpop.permute.xlu0 %1094
      %1096 = vrot.lane.b32.xlu0 %v353, 28
      %v1097 = vpop.permute.xlu0 %1096
      %1098 = vrot.lane.b32.xlu0 %v355, 28
      %v1099 = vpop.permute.xlu0 %1098
      %1100 = vrot.lane.b32.xlu0 %v358, 28
      %v1101 = vpop.permute.xlu0 %1100
      %1102 = vrot.lane.b32.xlu0 %v360, 28
      %v1103 = vpop.permute.xlu0 %1102
      %1104 = vrot.lane.b32.xlu0 %v363, 28
      %v1105 = vpop.permute.xlu0 %1104
      %1106 = vrot.lane.b32.xlu0 %v365, 28
      %v1107 = vpop.permute.xlu0 %1106
      %1108 = vrot.lane.b32.xlu0 %v368, 28
      %v1109 = vpop.permute.xlu0 %1108
      %1110 = vrot.lane.b32.xlu0 %v370, 28
      %v1111 = vpop.permute.xlu0 %1110
      %1112 = vrot.lane.b32.xlu0 %v373, 28
      %v1113 = vpop.permute.xlu0 %1112
      %1114 = vrot.lane.b32.xlu0 %v375, 28
      %v1115 = vpop.permute.xlu0 %1114
      %1116 = vrot.lane.b32.xlu0 %v378, 28
      %v1117 = vpop.permute.xlu0 %1116
      %1118 = vrot.lane.b32.xlu0 %v380, 28
      %v1119 = vpop.permute.xlu0 %1118
      %1120 = vrot.lane.b32.xlu0 %v467, 28
      %v1121 = vpop.permute.xlu0 %1120
      %1122 = vrot.lane.b32.xlu0 %v469, 28
      %v1123 = vpop.permute.xlu0 %1122
      %1124 = vrot.lane.b32.xlu0 %v480, 28
      %v1125 = vpop.permute.xlu0 %1124
      %1126 = vrot.lane.b32.xlu0 %v482, 28
      %v1127 = vpop.permute.xlu0 %1126
      %1160 = vrot.lane.b32.xlu0 %v394, 32
      %v1161 = vpop.permute.xlu0 %1160
      %1162 = vrot.lane.b32.xlu0 %v396, 32
      %v1163 = vpop.permute.xlu0 %1162
      %1164 = vrot.lane.b32.xlu0 %v399, 32
      %v1165 = vpop.permute.xlu0 %1164
      %1166 = vrot.lane.b32.xlu0 %v401, 32
      %v1167 = vpop.permute.xlu0 %1166
      %1168 = vrot.lane.b32.xlu0 %v404, 32
      %v1169 = vpop.permute.xlu0 %1168
      %1170 = vrot.lane.b32.xlu0 %v406, 32
      %v1171 = vpop.permute.xlu0 %1170
      %1172 = vrot.lane.b32.xlu0 %v409, 32
      %v1173 = vpop.permute.xlu0 %1172
      %1174 = vrot.lane.b32.xlu0 %v411, 32
      %v1175 = vpop.permute.xlu0 %1174
      %1176 = vrot.lane.b32.xlu0 %v414, 32
      %v1177 = vpop.permute.xlu0 %1176
      %1178 = vrot.lane.b32.xlu0 %v416, 32
      %v1179 = vpop.permute.xlu0 %1178
      %1180 = vrot.lane.b32.xlu0 %v419, 32
      %v1181 = vpop.permute.xlu0 %1180
      %1182 = vrot.lane.b32.xlu0 %v421, 32
      %v1183 = vpop.permute.xlu0 %1182
      %1184 = vrot.lane.b32.xlu0 %v424, 32
      %v1185 = vpop.permute.xlu0 %1184
      %1186 = vrot.lane.b32.xlu0 %v426, 32
      %v1187 = vpop.permute.xlu0 %1186
      %1188 = vrot.lane.b32.xlu0 %v429, 32
      %v1189 = vpop.permute.xlu0 %1188
      %1190 = vrot.lane.b32.xlu0 %v431, 32
      %v1191 = vpop.permute.xlu0 %1190
      %1192 = vrot.lane.b32.xlu0 %v434, 32
      %v1193 = vpop.permute.xlu0 %1192
      %1194 = vrot.lane.b32.xlu0 %v436, 32
      %v1195 = vpop.permute.xlu0 %1194
      %1196 = vrot.lane.b32.xlu0 %v439, 32
      %v1197 = vpop.permute.xlu0 %1196
      %1198 = vrot.lane.b32.xlu0 %v441, 32
      %v1199 = vpop.permute.xlu0 %1198
      %1200 = vrot.lane.b32.xlu0 %v444, 32
      %v1201 = vpop.permute.xlu0 %1200
      %1202 = vrot.lane.b32.xlu0 %v446, 32
      %v1203 = vpop.permute.xlu0 %1202
      %1204 = vrot.lane.b32.xlu0 %v449, 32
      %v1205 = vpop.permute.xlu0 %1204
      %1206 = vrot.lane.b32.xlu0 %v451, 32
      %v1207 = vpop.permute.xlu0 %1206
      %1208 = vrot.lane.b32.xlu0 %v454, 32
      %v1209 = vpop.permute.xlu0 %1208
      %1210 = vrot.lane.b32.xlu0 %v456, 32
      %v1211 = vpop.permute.xlu0 %1210
      %1212 = vrot.lane.b32.xlu0 %v459, 32
      %v1213 = vpop.permute.xlu0 %1212
      %1214 = vrot.lane.b32.xlu0 %v461, 32
      %v1215 = vpop.permute.xlu0 %1214
      %1216 = vrot.lane.b32.xlu0 %v472, 32
      %v1217 = vpop.permute.xlu0 %1216
      %1218 = vrot.lane.b32.xlu0 %v474, 32
      %v1219 = vpop.permute.xlu0 %1218
      %1220 = vrot.lane.b32.xlu0 %v485, 32
      %v1221 = vpop.permute.xlu0 %1220
      %1222 = vrot.lane.b32.xlu0 %v487, 32
      %v1223 = vpop.permute.xlu0 %1222
      %vm1256 = vcmask 31744
      %v1257 = vsel %vm1256, %v198, %v489
      %v1258 = vsel %vm1256, %v199, %v491
      %v1259 = vsel %vm1256, %v201, %v493
      %v1260 = vsel %vm1256, %v202, %v495
      %v1261 = vsel %vm1256, %v204, %v497
      %v1262 = vsel %vm1256, %v205, %v499
      %v1263 = vsel %vm1256, %v207, %v501
      %v1264 = vsel %vm1256, %v208, %v503
      %v1265 = vsel %vm1256, %v210, %v505
      %v1266 = vsel %vm1256, %v211, %v507
      %v1267 = vsel %vm1256, %v213, %v509
      %v1268 = vsel %vm1256, %v214, %v511
      %v1269 = vsel %vm1256, %v216, %v513
      %v1270 = vsel %vm1256, %v217, %v515
      %v1271 = vsel %vm1256, %v219, %v517
      %v1272 = vsel %vm1256, %v220, %v519
      %v1273 = vsel %vm1256, %v222, %v521
      %v1274 = vsel %vm1256, %v223, %v523
      %v1275 = vsel %vm1256, %v225, %v525
      %v1276 = vsel %vm1256, %v226, %v527
      %v1277 = vsel %vm1256, %v228, %v529
      %v1278 = vsel %vm1256, %v229, %v531
      %v1279 = vsel %vm1256, %v231, %v533
      %v1280 = vsel %vm1256, %v232, %v535
      %v1281 = vsel %vm1256, %v234, %v537
      %v1282 = vsel %vm1256, %v235, %v539
      %v1283 = vsel %vm1256, %v237, %v541
      %v1284 = vsel %vm1256, %v238, %v543
      %v1285 = vsel %vm1256, %v240, %v545
      %v1286 = vsel %vm1256, %v241, %v547
      %v1287 = vsel %vm1256, %v243, %v549
      %v1288 = vsel %vm1256, %v244, %v551
      %vm1289 = vcmask 64512
      %v1290 = vsel %vm1289, %v1257, %v585
      %v1291 = vsel %vm1289, %v1258, %v587
      %v1292 = vsel %vm1289, %v1259, %v589
      %v1293 = vsel %vm1289, %v1260, %v591
      %v1294 = vsel %vm1289, %v1261, %v593
      %v1295 = vsel %vm1289, %v1262, %v595
      %v1296 = vsel %vm1289, %v1263, %v597
      %v1297 = vsel %vm1289, %v1264, %v599
      %v1298 = vsel %vm1289, %v1265, %v601
      %v1299 = vsel %vm1289, %v1266, %v603
      %v1300 = vsel %vm1289, %v1267, %v605
      %v1301 = vsel %vm1289, %v1268, %v607
      %v1302 = vsel %vm1289, %v1269, %v609
      %v1303 = vsel %vm1289, %v1270, %v611
      %v1304 = vsel %vm1289, %v1271, %v613
      %v1305 = vsel %vm1289, %v1272, %v615
      %v1306 = vsel %vm1289, %v1273, %v617
      %v1307 = vsel %vm1289, %v1274, %v619
      %v1308 = vsel %vm1289, %v1275, %v621
      %v1309 = vsel %vm1289, %v1276, %v623
      %v1310 = vsel %vm1289, %v1277, %v625
      %v1311 = vsel %vm1289, %v1278, %v627
      %v1312 = vsel %vm1289, %v1279, %v629
      %v1313 = vsel %vm1289, %v1280, %v631
      %v1314 = vsel %vm1289, %v1281, %v633
      %v1315 = vsel %vm1289, %v1282, %v635
      %v1316 = vsel %vm1289, %v1283, %v637
      %v1317 = vsel %vm1289, %v1284, %v639
      %v1318 = vsel %vm1289, %v1285, %v641
      %v1319 = vsel %vm1289, %v1286, %v643
      %v1320 = vsel %vm1289, %v1287, %v645
      %v1321 = vsel %vm1289, %v1288, %v647
      %vm1322 = vcmask 97280
      %v1323 = vsel %vm1322, %v1290, %v681
      %v1324 = vsel %vm1322, %v1291, %v683
      %v1325 = vsel %vm1322, %v1292, %v685
      %v1326 = vsel %vm1322, %v1293, %v687
      %v1327 = vsel %vm1322, %v1294, %v689
      %v1328 = vsel %vm1322, %v1295, %v691
      %v1329 = vsel %vm1322, %v1296, %v693
      %v1330 = vsel %vm1322, %v1297, %v695
      %v1331 = vsel %vm1322, %v1298, %v697
      %v1332 = vsel %vm1322, %v1299, %v699
      %v1333 = vsel %vm1322, %v1300, %v701
      %v1334 = vsel %vm1322, %v1301, %v703
      %v1335 = vsel %vm1322, %v1302, %v705
      %v1336 = vsel %vm1322, %v1303, %v707
      %v1337 = vsel %vm1322, %v1304, %v709
      %v1338 = vsel %vm1322, %v1305, %v711
      %v1339 = vsel %vm1322, %v1306, %v713
      %v1340 = vsel %vm1322, %v1307, %v715
      %v1341 = vsel %vm1322, %v1308, %v717
      %v1342 = vsel %vm1322, %v1309, %v719
      %v1343 = vsel %vm1322, %v1310, %v721
      %v1344 = vsel %vm1322, %v1311, %v723
      %v1345 = vsel %vm1322, %v1312, %v725
      %v1346 = vsel %vm1322, %v1313, %v727
      %v1347 = vsel %vm1322, %v1314, %v729
      %v1348 = vsel %vm1322, %v1315, %v731
      %v1349 = vsel %vm1322, %v1316, %v733
      %v1350 = vsel %vm1322, %v1317, %v735
      %v1351 = vsel %vm1322, %v1318, %v737
      %v1352 = vsel %vm1322, %v1319, %v739
      %v1353 = vsel %vm1322, %v1320, %v741
      %v1354 = vsel %vm1322, %v1321, %v743
      %vm1355 = vcmask 130048
      %v1356 = vsel %vm1355, %v1323, %v777
      %v1357 = vsel %vm1355, %v1324, %v779
      %v1358 = vsel %vm1355, %v1325, %v781
      %v1359 = vsel %vm1355, %v1326, %v783
      %v1360 = vsel %vm1355, %v1327, %v785
      %v1361 = vsel %vm1355, %v1328, %v787
      %v1362 = vsel %vm1355, %v1329, %v789
      %v1363 = vsel %vm1355, %v1330, %v791
      %v1364 = vsel %vm1355, %v1331, %v793
      %v1365 = vsel %vm1355, %v1332, %v795
      %v1366 = vsel %vm1355, %v1333, %v797
      %v1367 = vsel %vm1355, %v1334, %v799
      %v1368 = vsel %vm1355, %v1335, %v801
      %v1369 = vsel %vm1355, %v1336, %v803
      %v1370 = vsel %vm1355, %v1337, %v805
      %v1371 = vsel %vm1355, %v1338, %v807
      %v1372 = vsel %vm1355, %v1339, %v809
      %v1373 = vsel %vm1355, %v1340, %v811
      %v1374 = vsel %vm1355, %v1341, %v813
      %v1375 = vsel %vm1355, %v1342, %v815
      %v1376 = vsel %vm1355, %v1343, %v817
      %v1377 = vsel %vm1355, %v1344, %v819
      %v1378 = vsel %vm1355, %v1345, %v821
      %v1379 = vsel %vm1355, %v1346, %v823
      %v1380 = vsel %vm1355, %v1347, %v825
      %v1381 = vsel %vm1355, %v1348, %v827
      %v1382 = vsel %vm1355, %v1349, %v829
      %v1383 = vsel %vm1355, %v1350, %v831
      %v1384 = vsel %vm1355, %v1351, %v833
      %v1385 = vsel %vm1355, %v1352, %v835
      %v1386 = vsel %vm1355, %v1353, %v837
      %v1387 = vsel %vm1355, %v1354, %v839
      %vm1388 = vcmask 162816
      %v1389 = vsel %vm1388, %v1356, %v873
      %v1390 = vsel %vm1388, %v1357, %v875
      %v1391 = vsel %vm1388, %v1358, %v877
      %v1392 = vsel %vm1388, %v1359, %v879
      %v1393 = vsel %vm1388, %v1360, %v881
      %v1394 = vsel %vm1388, %v1361, %v883
      %v1395 = vsel %vm1388, %v1362, %v885
      %v1396 = vsel %vm1388, %v1363, %v887
      %v1397 = vsel %vm1388, %v1364, %v889
      %v1398 = vsel %vm1388, %v1365, %v891
      %v1399 = vsel %vm1388, %v1366, %v893
      %v1400 = vsel %vm1388, %v1367, %v895
      %v1401 = vsel %vm1388, %v1368, %v897
      %v1402 = vsel %vm1388, %v1369, %v899
      %v1403 = vsel %vm1388, %v1370, %v901
      %v1404 = vsel %vm1388, %v1371, %v903
      %v1405 = vsel %vm1388, %v1372, %v905
      %v1406 = vsel %vm1388, %v1373, %v907
      %v1407 = vsel %vm1388, %v1374, %v909
      %v1408 = vsel %vm1388, %v1375, %v911
      %v1409 = vsel %vm1388, %v1376, %v913
      %v1410 = vsel %vm1388, %v1377, %v915
      %v1411 = vsel %vm1388, %v1378, %v917
      %v1412 = vsel %vm1388, %v1379, %v919
      %v1413 = vsel %vm1388, %v1380, %v921
      %v1414 = vsel %vm1388, %v1381, %v923
      %v1415 = vsel %vm1388, %v1382, %v925
      %v1416 = vsel %vm1388, %v1383, %v927
      %v1417 = vsel %vm1388, %v1384, %v929
      %v1418 = vsel %vm1388, %v1385, %v931
      %v1419 = vsel %vm1388, %v1386, %v933
      %v1420 = vsel %vm1388, %v1387, %v935
      %vm1421 = vcmask 195584
      %v1422 = vsel %vm1421, %v1389, %v969
      %v1423 = vsel %vm1421, %v1390, %v971
      %v1424 = vsel %vm1421, %v1391, %v973
      %v1425 = vsel %vm1421, %v1392, %v975
      %v1426 = vsel %vm1421, %v1393, %v977
      %v1427 = vsel %vm1421, %v1394, %v979
      %v1428 = vsel %vm1421, %v1395, %v981
      %v1429 = vsel %vm1421, %v1396, %v983
      %v1430 = vsel %vm1421, %v1397, %v985
      %v1431 = vsel %vm1421, %v1398, %v987
      %v1432 = vsel %vm1421, %v1399, %v989
      %v1433 = vsel %vm1421, %v1400, %v991
      %v1434 = vsel %vm1421, %v1401, %v993
      %v1435 = vsel %vm1421, %v1402, %v995
      %v1436 = vsel %vm1421, %v1403, %v997
      %v1437 = vsel %vm1421, %v1404, %v999
      %v1438 = vsel %vm1421, %v1405, %v1001
      %v1439 = vsel %vm1421, %v1406, %v1003
      %v1440 = vsel %vm1421, %v1407, %v1005
      %v1441 = vsel %vm1421, %v1408, %v1007
      %v1442 = vsel %vm1421, %v1409, %v1009
      %v1443 = vsel %vm1421, %v1410, %v1011
      %v1444 = vsel %vm1421, %v1411, %v1013
      %v1445 = vsel %vm1421, %v1412, %v1015
      %v1446 = vsel %vm1421, %v1413, %v1017
      %v1447 = vsel %vm1421, %v1414, %v1019
      %v1448 = vsel %vm1421, %v1415, %v1021
      %v1449 = vsel %vm1421, %v1416, %v1023
      %v1450 = vsel %vm1421, %v1417, %v1025
      %v1451 = vsel %vm1421, %v1418, %v1027
      %v1452 = vsel %vm1421, %v1419, %v1029
      %v1453 = vsel %vm1421, %v1420, %v1031
      %vm1454 = vcmask 228352
      %v1455 = vsel %vm1454, %v1422, %v1065
      %v1456 = vsel %vm1454, %v1423, %v1067
      %v1457 = vsel %vm1454, %v1424, %v1069
      %v1458 = vsel %vm1454, %v1425, %v1071
      %v1459 = vsel %vm1454, %v1426, %v1073
      %v1460 = vsel %vm1454, %v1427, %v1075
      %v1461 = vsel %vm1454, %v1428, %v1077
      %v1462 = vsel %vm1454, %v1429, %v1079
      %v1463 = vsel %vm1454, %v1430, %v1081
      %v1464 = vsel %vm1454, %v1431, %v1083
      %v1465 = vsel %vm1454, %v1432, %v1085
      %v1466 = vsel %vm1454, %v1433, %v1087
      %v1467 = vsel %vm1454, %v1434, %v1089
      %v1468 = vsel %vm1454, %v1435, %v1091
      %v1469 = vsel %vm1454, %v1436, %v1093
      %v1470 = vsel %vm1454, %v1437, %v1095
      %v1471 = vsel %vm1454, %v1438, %v1097
      %v1472 = vsel %vm1454, %v1439, %v1099
      %v1473 = vsel %vm1454, %v1440, %v1101
      %v1474 = vsel %vm1454, %v1441, %v1103
      %v1475 = vsel %vm1454, %v1442, %v1105
      %v1476 = vsel %vm1454, %v1443, %v1107
      %v1477 = vsel %vm1454, %v1444, %v1109
      %v1478 = vsel %vm1454, %v1445, %v1111
      %v1479 = vsel %vm1454, %v1446, %v1113
      %v1480 = vsel %vm1454, %v1447, %v1115
      %v1481 = vsel %vm1454, %v1448, %v1117
      %v1482 = vsel %vm1454, %v1449, %v1119
      %v1483 = vsel %vm1454, %v1450, %v1121
      %v1484 = vsel %vm1454, %v1451, %v1123
      %v1485 = vsel %vm1454, %v1452, %v1125
      %v1486 = vsel %vm1454, %v1453, %v1127
      %vm1487 = vcmask 261120
      %v1488 = vsel %vm1487, %v1455, %v1161
      %v1489 = vsel %vm1487, %v1456, %v1163
      %v1490 = vsel %vm1487, %v1457, %v1165
      %v1491 = vsel %vm1487, %v1458, %v1167
      %v1492 = vsel %vm1487, %v1459, %v1169
      %v1493 = vsel %vm1487, %v1460, %v1171
      %v1494 = vsel %vm1487, %v1461, %v1173
      %v1495 = vsel %vm1487, %v1462, %v1175
      %v1496 = vsel %vm1487, %v1463, %v1177
      %v1497 = vsel %vm1487, %v1464, %v1179
      %v1498 = vsel %vm1487, %v1465, %v1181
      %v1499 = vsel %vm1487, %v1466, %v1183
      %v1500 = vsel %vm1487, %v1467, %v1185
      %v1501 = vsel %vm1487, %v1468, %v1187
      %v1502 = vsel %vm1487, %v1469, %v1189
      %v1503 = vsel %vm1487, %v1470, %v1191
      %v1504 = vsel %vm1487, %v1471, %v1193
      %v1505 = vsel %vm1487, %v1472, %v1195
      %v1506 = vsel %vm1487, %v1473, %v1197
      %v1507 = vsel %vm1487, %v1474, %v1199
      %v1508 = vsel %vm1487, %v1475, %v1201
      %v1509 = vsel %vm1487, %v1476, %v1203
      %v1510 = vsel %vm1487, %v1477, %v1205
      %v1511 = vsel %vm1487, %v1478, %v1207
      %v1512 = vsel %vm1487, %v1479, %v1209
      %v1513 = vsel %vm1487, %v1480, %v1211
      %v1514 = vsel %vm1487, %v1481, %v1213
      %v1515 = vsel %vm1487, %v1482, %v1215
      %v1516 = vsel %vm1487, %v1483, %v1217
      %v1517 = vsel %vm1487, %v1484, %v1219
      %v1518 = vsel %vm1487, %v1485, %v1221
      %v1519 = vsel %vm1487, %v1486, %v1223
      %v1520 = vld [vmem:[%s1] sm:$0xff]
      %vm1521 = vcmask 293888
      %v1523 = vsel %vm1521, %v1520, 0
      %v1526 = vsel %vm1521, %v1488, 0
      %v1529 = vsel %vm1521, %v1489, 0
      %v1532 = vsel %vm1521, %v1490, 0
      %v1535 = vsel %vm1521, %v1491, 0
      %v1538 = vsel %vm1521, %v1492, 0
      %v1541 = vsel %vm1521, %v1493, 0
      %v1544 = vsel %vm1521, %v1494, 0
      %v1547 = vsel %vm1521, %v1495, 0
      %v1550 = vsel %vm1521, %v1496, 0
      %v1553 = vsel %vm1521, %v1497, 0
      %v1556 = vsel %vm1521, %v1498, 0
      %v1559 = vsel %vm1521, %v1499, 0
      %v1562 = vsel %vm1521, %v1500, 0
      %v1565 = vsel %vm1521, %v1501, 0
      %v1568 = vsel %vm1521, %v1502, 0
      %v1571 = vsel %vm1521, %v1503, 0
      %v1574 = vsel %vm1521, %v1504, 0
      %v1577 = vsel %vm1521, %v1505, 0
      %v1580 = vsel %vm1521, %v1506, 0
      %v1583 = vsel %vm1521, %v1507, 0
      %v1586 = vsel %vm1521, %v1508, 0
      %v1589 = vsel %vm1521, %v1509, 0
      %v1592 = vsel %vm1521, %v1510, 0
      %v1595 = vsel %vm1521, %v1511, 0
      %v1598 = vsel %vm1521, %v1512, 0
      %v1601 = vsel %vm1521, %v1513, 0
      %v1604 = vsel %vm1521, %v1514, 0
      %v1607 = vsel %vm1521, %v1515, 0
      %v1610 = vsel %vm1521, %v1516, 0
      %v1613 = vsel %vm1521, %v1517, 0
      %v1616 = vsel %vm1521, %v1518, 0
      %v1619 = vsel %vm1521, %v1519, 0
      %1621 = vmatprep.subr.mxu0 0.0
      %1622 = vmatpush1.xpose.msra.mxu0 %v1526
      %1623 = vmatprep.subr.mxu0 0.0
      %1624 = vmatpush1.xpose.msra.mxu0 %v1529
      %1625 = vmatprep.subr.mxu0 0.0
      %1626 = vmatpush1.xpose.msra.mxu0 %v1532
      %1627 = vmatprep.subr.mxu0 0.0
      %1628 = vmatpush1.xpose.msra.mxu0 %v1535
      %1629 = vmatprep.subr.mxu0 0.0
      %1630 = vmatpush1.xpose.msra.mxu0 %v1538
      %1631 = vmatprep.subr.mxu0 0.0
      %1632 = vmatpush1.xpose.msra.mxu0 %v1541
      %1633 = vmatprep.subr.mxu0 0.0
      %1634 = vmatpush1.xpose.msra.mxu0 %v1544
      %1635 = vmatprep.subr.mxu0 0.0
      %1636 = vmatpush1.xpose.msra.mxu0 %v1547
      %1637 = vmatprep.subr.mxu0 0.0
      %1638 = vmatpush1.xpose.msra.mxu0 %v1550
      %1639 = vmatprep.subr.mxu0 0.0
      %1640 = vmatpush1.xpose.msra.mxu0 %v1553
      %1641 = vmatprep.subr.mxu0 0.0
      %1642 = vmatpush1.xpose.msra.mxu0 %v1556
      %1643 = vmatprep.subr.mxu0 0.0
      %1644 = vmatpush1.xpose.msra.mxu0 %v1559
      %1645 = vmatprep.subr.mxu0 0.0
      %1646 = vmatpush1.xpose.msra.mxu0 %v1562
      %1647 = vmatprep.subr.mxu0 0.0
      %1648 = vmatpush1.xpose.msra.mxu0 %v1565
      %1649 = vmatprep.subr.mxu0 0.0
      %1650 = vmatpush1.xpose.msra.mxu0 %v1568
      %1651 = vmatprep.subr.mxu0 0.0
      %1652 = vmatpush1.xpose.msra.mxu0 %v1571
      %1653 = vmatprep.subr.mxu0 0.0
      %1654 = vmatpush1.xpose.msra.mxu0 %v1574
      %1655 = vmatprep.subr.mxu0 0.0
      %1656 = vmatpush1.xpose.msra.mxu0 %v1577
      %1657 = vmatprep.subr.mxu0 0.0
      %1658 = vmatpush1.xpose.msra.mxu0 %v1580
      %1659 = vmatprep.subr.mxu0 0.0
      %1660 = vmatpush1.xpose.msra.mxu0 %v1583
      %1661 = vmatprep.subr.mxu0 0.0
      %1662 = vmatpush1.xpose.msra.mxu0 %v1586
      %1663 = vmatprep.subr.mxu0 0.0
      %1664 = vmatpush1.xpose.msra.mxu0 %v1589
      %1665 = vmatprep.subr.mxu0 0.0
      %1666 = vmatpush1.xpose.msra.mxu0 %v1592
      %1667 = vmatprep.subr.mxu0 0.0
      %1668 = vmatpush1.xpose.msra.mxu0 %v1595
      %1669 = vmatprep.subr.mxu0 0.0
      %1670 = vmatpush1.xpose.msra.mxu0 %v1598
      %1671 = vmatprep.subr.mxu0 0.0
      %1672 = vmatpush1.xpose.msra.mxu0 %v1601
      %1673 = vmatprep.subr.mxu0 0.0
      %1674 = vmatpush1.xpose.msra.mxu0 %v1604
      %1675 = vmatprep.subr.mxu0 0.0
      %1676 = vmatpush1.xpose.msra.mxu0 %v1607
      %1677 = vmatprep.subr.mxu0 0.0
      %1678 = vmatpush1.xpose.msra.mxu0 %v1610
      %1679 = vmatprep.subr.mxu0 0.0
      %1680 = vmatpush1.xpose.msra.mxu0 %v1613
      %1681 = vmatprep.subr.mxu0 0.0
      %1682 = vmatpush1.xpose.msra.mxu0 %v1616
      %1683 = vmatprep.subr.mxu0 0.0
      %1684 = vmatpush1.xpose.msra.mxu0 %v1619
      %1685 = vmatprep.mubr.f32.mxu0 0.0
      %1686 = vmatmul.mubr.f32.gmra.mrb[0].mxu0 %v1523
      %v1687 = vpop.f32.mrb[0].mxu0
      %v1688 = vadd.f32 0.0, %v1687
      %v1689 = vpop.f32.mrb[0].mxu0
      %v1690 = vadd.f32 0.0, %v1689
      %1691 = vdwg.mxu0
      %v1692 = vld [vmem:[%s2] sm:$0xff]
      %1694 = vset.pattern.permute.xlu0 0
      %1695 = vperm.xlu0 %1694, %v1692
      %v1696 = vpop.permute.xlu0 %1695
      %v1698 = vmul.f32 %v1688, %v1696
      %v1699 = vmul.f32 %v1690, %v1696
      %v1700 = vld [vmem:[%s3] sm:$0xff]
      %1702 = vset.pattern.permute.xlu0 0
      %1703 = vperm.xlu0 %1702, %v1700
      %v1704 = vpop.permute.xlu0 %1703
      %v1706 = vadd.f32 %v1698, %v1704
      %v1707 = vadd.f32 %v1699, %v1704
      %1708 = vst [vmem:[%s197] sm:$0xff] %v1706
      %1709 = vst [vmem:[%s197 + $0x8] sm:$0xff] %v1707
      %p1710 = scmp.lt.s32.totalorder %s15, 1
      %s1711 = scalar_select %p1710, %s15, 1
      %s1712 = smul.addr %s1711, 2
      %s1713 = smul.addr %s1712, 8
      %s1714 = scalar_lea.vmem %s4, %s1713
      // Predicated region
      $region37: #{conv_bn.3} parent=35 // pred_check
        %p1715 = pneg %p122
      $region38: #{conv_bn.3} parent=35 // pred_check_branch
        %1717 = sbr.rel (%p1715) target = $region40
      $region39: #{conv_bn.3} parent=35 // pred_region
        _
      $region40: #{conv_bn.3} parent=35 // pred_fallthru
        _
    $region36: #{conv_bn.3} parent=5 // pred_fallthru
      _
    %p1718 = scmp.le.s32.totalorder 2, %s10
    // Predicated region
    $region41: #{conv_bn.3} parent=5 // pred_check
      %p1719 = pneg %p1718
    $region42: #{conv_bn.3} parent=5 // pred_check_branch
      %1721 = sbr.rel (%p1719) target = $region44
    $region43: #{conv_bn.3} parent=5 // pred_region
      %s1722 = ssub.s32 %s10, 2
      // Predicated region
      $region45: #{conv_bn.3} parent=43 // pred_check
        %p1723 = pneg %p128
      $region46: #{conv_bn.3} parent=43 // pred_check_branch
        %1725 = sbr.rel (%p1723) target = $region48
      $region47: #{conv_bn.3} parent=43 // pred_region
        %p1726 = scmp.lt.s32.totalorder %s16, 1
        %s1727 = scalar_select %p1726, %s16, 1
        %s1728 = smul.addr %s1727, 2
        %s1729 = smul.addr %s1728, 8
        %s1730 = scalar_lea.vmem %s4, %s1729
      $region48: #{conv_bn.3} parent=43 // pred_fallthru
        _
    $region44: #{conv_bn.3} parent=5 // pred_fallthru
      _
  $region6: #{conv_bn.3} parent=0 // loop_footer
    %s14 = sadd.s32 1, %s10
  $region7: #{conv_bn.3} parent=0 // loop_footer_branch
    %9 = sbr.rel target = $region3
  $region8: #{conv_bn.3} parent=0 // loop_exit
    _

// kernel: conv_bn.2
$region0: #{conv_bn.2}
  #allocation0 [shape = 'u32[]', space=smem, size = 0x4, offset = 0x4, fixed_abs, tag = 'smem constant byte address 0x4 - core index']
  #allocation1 [shape = 'u32[144,128]{1,0:T(1,128)}', space=vmem, size = 0x12000, scoped, tag = 'internal scratch']
  %s0 = inlined_call_operand.vmem [shape: f32[2,18,18,4], index: 0, kind: input, shape index: {}]
  %s1 = inlined_call_operand.vmem [shape: f32[8,36], index: 1, kind: input, shape index: {}]
  %s2 = inlined_call_operand.vmem [shape: f32[2,8,2], index: 2, kind: output, shape index: {}]
  %s3 = sld [smem:[#allocation0]]
  $region41: #{conv_bn.2} parent=0
    _
  %s5 = ssub.s32 1, %s3
  %s6 = scalar_select 0, %s5, %s3
  loop: start=0, step=1, limit=4
  $region2: #{conv_bn.2} parent=0 // loop_pre_header
    _
  $region3: #{conv_bn.2} parent=0 // loop_header
    %s8 = sphi 0, %s12
    %p9 = scmp.ge.s32.totalorder %s8, 4
    %s18 = sphi 0, %s20
    %s21 = sphi 0, %s18
    %s22 = sphi 0, %s21
    %s38 = sphi 0, %s22
    %s42 = sphi 0, %s42
    %s44 = sphi 0, %s42
    %s45 = sphi 0, %s44
    %s59 = sphi 0, %s45
    %s65 = sphi 0, %s67
    %s68 = sphi 0, %s65
    %s69 = sphi 0, %s68
    %s85 = sphi 0, %s69
  $region4: #{conv_bn.2} parent=0 // loop_header_branch
    %11 = sbr.rel (%p9) target = $region8
  $region5: #{conv_bn.2} parent=0 // loop_body
    %s13 = ssub.s32 %s8, 1
    %s14 = ssub.s32 %s8, 2
    %s15 = sadd.s32 %s8, 1
    %s16 = ssub.s32 %s8, %s15
    %p17 = scmp.eq.s32.totalorder %s16, 0
    %s19 = sadd.s32 %s18, 1
    %s20 = scalar_select %p17, %s18, %s19
    %p23 = pneg %p17
    %p24 = scmp.eq.s32.totalorder %s8, 1
    %p25 = por %p23, %p24
    %p26 = scmp.ne.s32.totalorder %s18, %s21
    %p27 = scmp.eq.s32.totalorder %s8, 0
    %p28 = por %p26, %p27
    %p29 = scmp.ne.s32.totalorder %s18, %s21
    %p30 = scmp.eq.s32.totalorder %s13, 1
    %p31 = por %p29, %p30
    %p32 = scmp.ne.s32.totalorder %s21, %s22
    %p33 = scmp.eq.s32.totalorder %s13, 0
    %p34 = por %p32, %p33
    %p35 = scmp.ne.s32.totalorder %s21, %s22
    %p36 = scmp.eq.s32.totalorder %s14, 1
    %p37 = por %p35, %p36
    %p39 = scmp.ne.s32.totalorder %s22, %s38
    %p40 = scmp.eq.s32.totalorder %s14, 0
    %p41 = por %p39, %p40
    %s43 = sadd.s32 %s42, 1
    %p46 = scmp.eq.s32.totalorder %s8, 1
    %p47 = scmp.ne.s32.totalorder %s42, %s44
    %p48 = scmp.eq.s32.totalorder %s8, 0
    %p49 = por %p47, %p48
    %p50 = scmp.ne.s32.totalorder %s42, %s44
    %p51 = scmp.eq.s32.totalorder %s13, 1
    %p52 = por %p50, %p51
    %p53 = scmp.ne.s32.totalorder %s44, %s45
    %p54 = scmp.eq.s32.totalorder %s13, 0
    %p55 = por %p53, %p54
    %p56 = scmp.ne.s32.totalorder %s44, %s45
    %p57 = scmp.eq.s32.totalorder %s14, 1
    %p58 = por %p56, %p57
    %p60 = scmp.ne.s32.totalorder %s45, %s59
    %p61 = scmp.eq.s32.totalorder %s14, 0
    %p62 = por %p60, %p61
    %s63 = ssub.s32 %s8, %s15
    %p64 = scmp.eq.s32.totalorder %s63, 0
    %s66 = sadd.s32 %s65, 1
    %s67 = scalar_select %p64, %s65, %s66
    %p70 = pneg %p64
    %p71 = scmp.eq.s32.totalorder %s8, 1
    %p72 = por %p70, %p71
    %p73 = scmp.ne.s32.totalorder %s65, %s68
    %p74 = scmp.eq.s32.totalorder %s8, 0
    %p75 = por %p73, %p74
    %p76 = scmp.ne.s32.totalorder %s65, %s68
    %p77 = scmp.eq.s32.totalorder %s13, 1
    %p78 = por %p76, %p77
    %p79 = scmp.ne.s32.totalorder %s68, %s69
    %p80 = scmp.eq.s32.totalorder %s13, 0
    %p81 = por %p79, %p80
    %p82 = scmp.ne.s32.totalorder %s68, %s69
    %p83 = scmp.eq.s32.totalorder %s14, 1
    %p84 = por %p82, %p83
    %p86 = scmp.ne.s32.totalorder %s69, %s85
    %p87 = scmp.eq.s32.totalorder %s14, 0
    %p88 = por %p86, %p87
    %p89 = scmp.le.s32.totalorder 1, %s8
    %p90 = scmp.lt.s32.totalorder %s8, 3
    %p91 = pnand %p89, %p90
    %p92 = pneg %p91
    // Predicated region
    $region9: #{conv_bn.2} parent=5 // pred_check
      _
    $region10: #{conv_bn.2} parent=5 // pred_check_branch
      %94 = sbr.rel (%p91) target = $region12
    $region11: #{conv_bn.2} parent=5 // pred_region
      %s95 = ssub.s32 %s8, 1
      // Predicated region
      $region13: #{conv_bn.2} parent=11 // pred_check
        %p96 = pneg %p55
      $region14: #{conv_bn.2} parent=11 // pred_check_branch
        %98 = sbr.rel (%p96) target = $region16
      $region15: #{conv_bn.2} parent=11 // pred_region
        _
      $region16: #{conv_bn.2} parent=11 // pred_fallthru
        _
    $region12: #{conv_bn.2} parent=5 // pred_fallthru
      _
    %p99 = scmp.lt.s32.totalorder %s8, 2
    // Predicated region
    $region17: #{conv_bn.2} parent=5 // pred_check
      %p100 = pneg %p99
    $region18: #{conv_bn.2} parent=5 // pred_check_branch
      %102 = sbr.rel (%p100) target = $region20
    $region19: #{conv_bn.2} parent=5 // pred_region
      // Predicated region
      $region21: #{conv_bn.2} parent=19 // pred_check
        %p103 = pneg %p28
      $region22: #{conv_bn.2} parent=19 // pred_check_branch
        %105 = sbr.rel (%p103) target = $region24
      $region23: #{conv_bn.2} parent=19 // pred_region
        %p106 = scmp.lt.s32.totalorder %s8, 1
        %s107 = scalar_select %p106, %s8, 1
        %s108 = smul.addr %s107, 54
        %s109 = smul.addr %s108, 8
        %s110 = scalar_lea.vmem %s0, %s109
      $region24: #{conv_bn.2} parent=19 // pred_fallthru
        _
    $region20: #{conv_bn.2} parent=5 // pred_fallthru
      _
    %p111 = scmp.le.s32.totalorder 1, %s8
    %p112 = scmp.lt.s32.totalorder %s8, 3
    %p113 = pnand %p111, %p112
    %p114 = pneg %p113
    // Predicated region
    $region25: #{conv_bn.2} parent=5 // pred_check
      _
    $region26: #{conv_bn.2} parent=5 // pred_check_branch
      %116 = sbr.rel (%p113) target = $region28
    $region27: #{conv_bn.2} parent=5 // pred_region
      %s117 = ssub.s32 %s8, 1
      %p118 = scmp.lt.s32.totalorder %s13, 1
      %s119 = scalar_select %p118, %s13, 1
      %s120 = smul.addr %s119, 54
      %s121 = smul.addr %s120, 8
      %s122 = scalar_lea.vmem %s0, %s121
      %p123 = pneg %p34
      %p124 = pneg %p31
      %p125 = pneg %p55
      %p126 = pneg %p52
      %p127 = pneg %p81
      %p128 = pneg %p78
      %p129 = scmp.lt.s32.totalorder %s13, 1
      %s130 = scalar_select %p129, %s13, 1
      %s131 = smul.addr %s130, 8
      %s132 = scalar_lea.vmem %s2, %s131
      %p133 = scmp.lt.s32.totalorder %s13, 1
      %s134 = scalar_select %p133, %s13, 1
      %s135 = smul.addr %s134, 54
      %s136 = smul.addr %s135, 8
      %s137 = scalar_lea.vmem %s0, %s136
      %p138 = scmp.lt.s32.totalorder %s13, 1
      %s139 = scalar_select %p138, %s13, 1
      %s140 = smul.addr %s139, 8
      %s141 = scalar_lea.vmem %s2, %s140
      %v142 = vld [vmem:[%s137] sm:$0xff]
      %v143 = vld [vmem:[%s137 + $0x8] sm:$0xff]
      %v144 = vld [vmem:[%s137 + $0x10] sm:$0x3]
      %v145 = vld [vmem:[%s137 + $0x18] sm:$0xff]
      %v146 = vld [vmem:[%s137 + $0x20] sm:$0xff]
      %v147 = vld [vmem:[%s137 + $0x28] sm:$0x3]
      %v148 = vld [vmem:[%s137 + $0x30] sm:$0xff]
      %v149 = vld [vmem:[%s137 + $0x38] sm:$0xff]
      %v150 = vld [vmem:[%s137 + $0x40] sm:$0x3]
      %v151 = vld [vmem:[%s137 + $0x48] sm:$0xff]
      %v152 = vld [vmem:[%s137 + $0x50] sm:$0xff]
      %v153 = vld [vmem:[%s137 + $0x58] sm:$0x3]
      %v154 = vld [vmem:[%s137 + $0x60] sm:$0xff]
      %v155 = vld [vmem:[%s137 + $0x68] sm:$0xff]
      %v156 = vld [vmem:[%s137 + $0x70] sm:$0x3]
      %v157 = vld [vmem:[%s137 + $0x78] sm:$0xff]
      %v158 = vld [vmem:[%s137 + $0x80] sm:$0xff]
      %v159 = vld [vmem:[%s137 + $0x88] sm:$0x3]
      %v160 = vld [vmem:[%s137 + $0x90] sm:$0xff]
      %v161 = vld [vmem:[%s137 + $0x98] sm:$0xff]
      %v162 = vld [vmem:[%s137 + $0xa0] sm:$0x3]
      %v163 = vld [vmem:[%s137 + $0xa8] sm:$0xff]
      %v164 = vld [vmem:[%s137 + $0xb0] sm:$0xff]
      %v165 = vld [vmem:[%s137 + $0xb8] sm:$0x3]
      %v166 = vld [vmem:[%s137 + $0xc0] sm:$0xff]
      %v167 = vld [vmem:[%s137 + $0xc8] sm:$0xff]
      %v168 = vld [vmem:[%s137 + $0xd0] sm:$0x3]
      %v169 = vld [vmem:[%s137 + $0xd8] sm:$0xff]
      %v170 = vld [vmem:[%s137 + $0xe0] sm:$0xff]
      %v171 = vld [vmem:[%s137 + $0xe8] sm:$0x3]
      %v172 = vld [vmem:[%s137 + $0xf0] sm:$0xff]
      %v173 = vld [vmem:[%s137 + $0xf8] sm:$0xff]
      %v174 = vld [vmem:[%s137 + $0x100] sm:$0x3]
      %v175 = vld [vmem:[%s137 + $0x108] sm:$0xff]
      %v176 = vld [vmem:[%s137 + $0x110] sm:$0xff]
      %v177 = vld [vmem:[%s137 + $0x118] sm:$0x3]
      %v178 = vld [vmem:[%s137 + $0x120] sm:$0xff]
      %v179 = vld [vmem:[%s137 + $0x128] sm:$0xff]
      %v180 = vld [vmem:[%s137 + $0x130] sm:$0x3]
      %v181 = vld [vmem:[%s137 + $0x138] sm:$0xff]
      %v182 = vld [vmem:[%s137 + $0x140] sm:$0xff]
      %v183 = vld [vmem:[%s137 + $0x148] sm:$0x3]
      %v184 = vld [vmem:[%s137 + $0x150] sm:$0xff]
      %v185 = vld [vmem:[%s137 + $0x158] sm:$0xff]
      %v186 = vld [vmem:[%s137 + $0x160] sm:$0x3]
      %v187 = vld [vmem:[%s137 + $0x168] sm:$0xff]
      %v188 = vld [vmem:[%s137 + $0x170] sm:$0xff]
      %v189 = vld [vmem:[%s137 + $0x178] sm:$0x3]
      %v190 = vld [vmem:[%s137 + $0x180] sm:$0xff]
      %v191 = vld [vmem:[%s137 + $0x188] sm:$0xff]
      %v192 = vld [vmem:[%s137 + $0x190] sm:$0x3]
      %v193 = vld [vmem:[%s137 + $0x198] sm:$0xff]
      %v194 = vld [vmem:[%s137 + $0x1a0] sm:$0xff]
      %v195 = vld [vmem:[%s137 + $0x1a8] sm:$0x3]
      %vm244 = vcmask 1046528
      %v245 = vrot.slane %v142, 1
      %v246 = vrot.slane %v143, 1
      %v247 = vsel %vm244, %v245, %v246
      %v248 = vrot.slane %v144, 1
      %v249 = vsel %vm244, %v246, %v248
      %v250 = vrot.slane %v145, 1
      %v251 = vrot.slane %v146, 1
      %v252 = vsel %vm244, %v250, %v251
      %v253 = vrot.slane %v147, 1
      %v254 = vsel %vm244, %v251, %v253
      %v255 = vrot.slane %v148, 1
      %v256 = vrot.slane %v149, 1
      %v257 = vsel %vm244, %v255, %v256
      %v258 = vrot.slane %v150, 1
      %v259 = vsel %vm244, %v256, %v258
      %v260 = vrot.slane %v151, 1
      %v261 = vrot.slane %v152, 1
      %v262 = vsel %vm244, %v260, %v261
      %v263 = vrot.slane %v153, 1
      %v264 = vsel %vm244, %v261, %v263
      %v265 = vrot.slane %v154, 1
      %v266 = vrot.slane %v155, 1
      %v267 = vsel %vm244, %v265, %v266
      %v268 = vrot.slane %v156, 1
      %v269 = vsel %vm244, %v266, %v268
      %v270 = vrot.slane %v157, 1
      %v271 = vrot.slane %v158, 1
      %v272 = vsel %vm244, %v270, %v271
      %v273 = vrot.slane %v159, 1
      %v274 = vsel %vm244, %v271, %v273
      %v275 = vrot.slane %v160, 1
      %v276 = vrot.slane %v161, 1
      %v277 = vsel %vm244, %v275, %v276
      %v278 = vrot.slane %v162, 1
      %v279 = vsel %vm244, %v276, %v278
      %v280 = vrot.slane %v163, 1
      %v281 = vrot.slane %v164, 1
      %v282 = vsel %vm244, %v280, %v281
      %v283 = vrot.slane %v165, 1
      %v284 = vsel %vm244, %v281, %v283
      %v285 = vrot.slane %v166, 1
      %v286 = vrot.slane %v167, 1
      %v287 = vsel %vm244, %v285, %v286
      %v288 = vrot.slane %v168, 1
      %v289 = vsel %vm244, %v286, %v288
      %v290 = vrot.slane %v169, 1
      %v291 = vrot.slane %v170, 1
      %v292 = vsel %vm244, %v290, %v291
      %v293 = vrot.slane %v171, 1
      %v294 = vsel %vm244, %v291, %v293
      %v295 = vrot.slane %v172, 1
      %v296 = vrot.slane %v173, 1
      %v297 = vsel %vm244, %v295, %v296
      %v298 = vrot.slane %v174, 1
      %v299 = vsel %vm244, %v296, %v298
      %v300 = vrot.slane %v175, 1
      %v301 = vrot.slane %v176, 1
      %v302 = vsel %vm244, %v300, %v301
      %v303 = vrot.slane %v177, 1
      %v304 = vsel %vm244, %v301, %v303
      %v305 = vrot.slane %v178, 1
      %v306 = vrot.slane %v179, 1
      %v307 = vsel %vm244, %v305, %v306
      %v308 = vrot.slane %v180, 1
      %v309 = vsel %vm244, %v306, %v308
      %v310 = vrot.slane %v181, 1
      %v311 = vrot.slane %v182, 1
      %v312 = vsel %vm244, %v310, %v311
      %v313 = vrot.slane %v183, 1
      %v314 = vsel %vm244, %v311, %v313
      %v315 = vrot.slane %v184, 1
      %v316 = vrot.slane %v185, 1
      %v317 = vsel %vm244, %v315, %v316
      %v318 = vrot.slane %v186, 1
      %v319 = vsel %vm244, %v316, %v318
      %v320 = vrot.slane %v187, 1
      %v321 = vrot.slane %v188, 1
      %v322 = vsel %vm244, %v320, %v321
      %v323 = vrot.slane %v189, 1
      %v324 = vsel %vm244, %v321, %v323
      %vm325 = vcmask 1045504
      %v326 = vrot.slane %v142, 2
      %v327 = vrot.slane %v143, 2
      %v328 = vsel %vm325, %v326, %v327
      %v329 = vrot.slane %v144, 2
      %v330 = vsel %vm325, %v327, %v329
      %v331 = vrot.slane %v145, 2
      %v332 = vrot.slane %v146, 2
      %v333 = vsel %vm325, %v331, %v332
      %v334 = vrot.slane %v147, 2
      %v335 = vsel %vm325, %v332, %v334
      %v336 = vrot.slane %v148, 2
      %v337 = vrot.slane %v149, 2
      %v338 = vsel %vm325, %v336, %v337
      %v339 = vrot.slane %v150, 2
      %v340 = vsel %vm325, %v337, %v339
      %v341 = vrot.slane %v151, 2
      %v342 = vrot.slane %v152, 2
      %v343 = vsel %vm325, %v341, %v342
      %v344 = vrot.slane %v153, 2
      %v345 = vsel %vm325, %v342, %v344
      %v346 = vrot.slane %v154, 2
      %v347 = vrot.slane %v155, 2
      %v348 = vsel %vm325, %v346, %v347
      %v349 = vrot.slane %v156, 2
      %v350 = vsel %vm325, %v347, %v349
      %v351 = vrot.slane %v157, 2
      %v352 = vrot.slane %v158, 2
      %v353 = vsel %vm325, %v351, %v352
      %v354 = vrot.slane %v159, 2
      %v355 = vsel %vm325, %v352, %v354
      %v356 = vrot.slane %v160, 2
      %v357 = vrot.slane %v161, 2
      %v358 = vsel %vm325, %v356, %v357
      %v359 = vrot.slane %v162, 2
      %v360 = vsel %vm325, %v357, %v359
      %v361 = vrot.slane %v163, 2
      %v362 = vrot.slane %v164, 2
      %v363 = vsel %vm325, %v361, %v362
      %v364 = vrot.slane %v165, 2
      %v365 = vsel %vm325, %v362, %v364
      %v366 = vrot.slane %v166, 2
      %v367 = vrot.slane %v167, 2
      %v368 = vsel %vm325, %v366, %v367
      %v369 = vrot.slane %v168, 2
      %v370 = vsel %vm325, %v367, %v369
      %v371 = vrot.slane %v169, 2
      %v372 = vrot.slane %v170, 2
      %v373 = vsel %vm325, %v371, %v372
      %v374 = vrot.slane %v171, 2
      %v375 = vsel %vm325, %v372, %v374
      %v376 = vrot.slane %v172, 2
      %v377 = vrot.slane %v173, 2
      %v378 = vsel %vm325, %v376, %v377
      %v379 = vrot.slane %v174, 2
      %v380 = vsel %vm325, %v377, %v379
      %v381 = vrot.slane %v175, 2
      %v382 = vrot.slane %v176, 2
      %v383 = vsel %vm325, %v381, %v382
      %v384 = vrot.slane %v177, 2
      %v385 = vsel %vm325, %v382, %v384
      %v386 = vrot.slane %v178, 2
      %v387 = vrot.slane %v179, 2
      %v388 = vsel %vm325, %v386, %v387
      %v389 = vrot.slane %v180, 2
      %v390 = vsel %vm325, %v387, %v389
      %v391 = vrot.slane %v181, 2
      %v392 = vrot.slane %v182, 2
      %v393 = vsel %vm325, %v391, %v392
      %v394 = vrot.slane %v183, 2
      %v395 = vsel %vm325, %v392, %v394
      %v396 = vrot.slane %v184, 2
      %v397 = vrot.slane %v185, 2
      %v398 = vsel %vm325, %v396, %v397
      %v399 = vrot.slane %v186, 2
      %v400 = vsel %vm325, %v397, %v399
      %v401 = vrot.slane %v187, 2
      %v402 = vrot.slane %v188, 2
      %v403 = vsel %vm325, %v401, %v402
      %v404 = vrot.slane %v189, 2
      %v405 = vsel %vm325, %v402, %v404
      %v409 = vrot.slane %v190, 1
      %v410 = vrot.slane %v191, 1
      %v411 = vsel %vm244, %v409, %v410
      %v412 = vrot.slane %v192, 1
      %v413 = vsel %vm244, %v410, %v412
      %v414 = vrot.slane %v190, 2
      %v415 = vrot.slane %v191, 2
      %v416 = vsel %vm325, %v414, %v415
      %v417 = vrot.slane %v192, 2
      %v418 = vsel %vm325, %v415, %v417
      %v422 = vrot.slane %v193, 1
      %v423 = vrot.slane %v194, 1
      %v424 = vsel %vm244, %v422, %v423
      %v425 = vrot.slane %v195, 1
      %v426 = vsel %vm244, %v423, %v425
      %v427 = vrot.slane %v193, 2
      %v428 = vrot.slane %v194, 2
      %v429 = vsel %vm325, %v427, %v428
      %v430 = vrot.slane %v195, 2
      %v431 = vsel %vm325, %v428, %v430
      %432 = vrot.lane.b32.xlu0 %v247, 4
      %v433 = vpop.permute.xlu0 %432
      %434 = vrot.lane.b32.xlu0 %v249, 4
      %v435 = vpop.permute.xlu0 %434
      %436 = vrot.lane.b32.xlu0 %v252, 4
      %v437 = vpop.permute.xlu0 %436
      %438 = vrot.lane.b32.xlu0 %v254, 4
      %v439 = vpop.permute.xlu0 %438
      %440 = vrot.lane.b32.xlu0 %v257, 4
      %v441 = vpop.permute.xlu0 %440
      %442 = vrot.lane.b32.xlu0 %v259, 4
      %v443 = vpop.permute.xlu0 %442
      %444 = vrot.lane.b32.xlu0 %v262, 4
      %v445 = vpop.permute.xlu0 %444
      %446 = vrot.lane.b32.xlu0 %v264, 4
      %v447 = vpop.permute.xlu0 %446
      %448 = vrot.lane.b32.xlu0 %v267, 4
      %v449 = vpop.permute.xlu0 %448
      %450 = vrot.lane.b32.xlu0 %v269, 4
      %v451 = vpop.permute.xlu0 %450
      %452 = vrot.lane.b32.xlu0 %v272, 4
      %v453 = vpop.permute.xlu0 %452
      %454 = vrot.lane.b32.xlu0 %v274, 4
      %v455 = vpop.permute.xlu0 %454
      %456 = vrot.lane.b32.xlu0 %v277, 4
      %v457 = vpop.permute.xlu0 %456
      %458 = vrot.lane.b32.xlu0 %v279, 4
      %v459 = vpop.permute.xlu0 %458
      %460 = vrot.lane.b32.xlu0 %v282, 4
      %v461 = vpop.permute.xlu0 %460
      %462 = vrot.lane.b32.xlu0 %v284, 4
      %v463 = vpop.permute.xlu0 %462
      %464 = vrot.lane.b32.xlu0 %v287, 4
      %v465 = vpop.permute.xlu0 %464
      %466 = vrot.lane.b32.xlu0 %v289, 4
      %v467 = vpop.permute.xlu0 %466
      %468 = vrot.lane.b32.xlu0 %v292, 4
      %v469 = vpop.permute.xlu0 %468
      %470 = vrot.lane.b32.xlu0 %v294, 4
      %v471 = vpop.permute.xlu0 %470
      %472 = vrot.lane.b32.xlu0 %v297, 4
      %v473 = vpop.permute.xlu0 %472
      %474 = vrot.lane.b32.xlu0 %v299, 4
      %v475 = vpop.permute.xlu0 %474
      %476 = vrot.lane.b32.xlu0 %v302, 4
      %v477 = vpop.permute.xlu0 %476
      %478 = vrot.lane.b32.xlu0 %v304, 4
      %v479 = vpop.permute.xlu0 %478
      %480 = vrot.lane.b32.xlu0 %v307, 4
      %v481 = vpop.permute.xlu0 %480
      %482 = vrot.lane.b32.xlu0 %v309, 4
      %v483 = vpop.permute.xlu0 %482
      %484 = vrot.lane.b32.xlu0 %v312, 4
      %v485 = vpop.permute.xlu0 %484
      %486 = vrot.lane.b32.xlu0 %v314, 4
      %v487 = vpop.permute.xlu0 %486
      %488 = vrot.lane.b32.xlu0 %v317, 4
      %v489 = vpop.permute.xlu0 %488
      %490 = vrot.lane.b32.xlu0 %v319, 4
      %v491 = vpop.permute.xlu0 %490
      %492 = vrot.lane.b32.xlu0 %v322, 4
      %v493 = vpop.permute.xlu0 %492
      %494 = vrot.lane.b32.xlu0 %v324, 4
      %v495 = vpop.permute.xlu0 %494
      %528 = vrot.lane.b32.xlu0 %v328, 8
      %v529 = vpop.permute.xlu0 %528
      %530 = vrot.lane.b32.xlu0 %v330, 8
      %v531 = vpop.permute.xlu0 %530
      %532 = vrot.lane.b32.xlu0 %v333, 8
      %v533 = vpop.permute.xlu0 %532
      %534 = vrot.lane.b32.xlu0 %v335, 8
      %v535 = vpop.permute.xlu0 %534
      %536 = vrot.lane.b32.xlu0 %v338, 8
      %v537 = vpop.permute.xlu0 %536
      %538 = vrot.lane.b32.xlu0 %v340, 8
      %v539 = vpop.permute.xlu0 %538
      %540 = vrot.lane.b32.xlu0 %v343, 8
      %v541 = vpop.permute.xlu0 %540
      %542 = vrot.lane.b32.xlu0 %v345, 8
      %v543 = vpop.permute.xlu0 %542
      %544 = vrot.lane.b32.xlu0 %v348, 8
      %v545 = vpop.permute.xlu0 %544
      %546 = vrot.lane.b32.xlu0 %v350, 8
      %v547 = vpop.permute.xlu0 %546
      %548 = vrot.lane.b32.xlu0 %v353, 8
      %v549 = vpop.permute.xlu0 %548
      %550 = vrot.lane.b32.xlu0 %v355, 8
      %v551 = vpop.permute.xlu0 %550
      %552 = vrot.lane.b32.xlu0 %v358, 8
      %v553 = vpop.permute.xlu0 %552
      %554 = vrot.lane.b32.xlu0 %v360, 8
      %v555 = vpop.permute.xlu0 %554
      %556 = vrot.lane.b32.xlu0 %v363, 8
      %v557 = vpop.permute.xlu0 %556
      %558 = vrot.lane.b32.xlu0 %v365, 8
      %v559 = vpop.permute.xlu0 %558
      %560 = vrot.lane.b32.xlu0 %v368, 8
      %v561 = vpop.permute.xlu0 %560
      %562 = vrot.lane.b32.xlu0 %v370, 8
      %v563 = vpop.permute.xlu0 %562
      %564 = vrot.lane.b32.xlu0 %v373, 8
      %v565 = vpop.permute.xlu0 %564
      %566 = vrot.lane.b32.xlu0 %v375, 8
      %v567 = vpop.permute.xlu0 %566
      %568 = vrot.lane.b32.xlu0 %v378, 8
      %v569 = vpop.permute.xlu0 %568
      %570 = vrot.lane.b32.xlu0 %v380, 8
      %v571 = vpop.permute.xlu0 %570
      %572 = vrot.lane.b32.xlu0 %v383, 8
      %v573 = vpop.permute.xlu0 %572
      %574 = vrot.lane.b32.xlu0 %v385, 8
      %v575 = vpop.permute.xlu0 %574
      %576 = vrot.lane.b32.xlu0 %v388, 8
      %v577 = vpop.permute.xlu0 %576
      %578 = vrot.lane.b32.xlu0 %v390, 8
      %v579 = vpop.permute.xlu0 %578
      %580 = vrot.lane.b32.xlu0 %v393, 8
      %v581 = vpop.permute.xlu0 %580
      %582 = vrot.lane.b32.xlu0 %v395, 8
      %v583 = vpop.permute.xlu0 %582
      %584 = vrot.lane.b32.xlu0 %v398, 8
      %v585 = vpop.permute.xlu0 %584
      %586 = vrot.lane.b32.xlu0 %v400, 8
      %v587 = vpop.permute.xlu0 %586
      %588 = vrot.lane.b32.xlu0 %v403, 8
      %v589 = vpop.permute.xlu0 %588
      %590 = vrot.lane.b32.xlu0 %v405, 8
      %v591 = vpop.permute.xlu0 %590
      %624 = vrot.lane.b32.xlu0 %v145, 12
      %v625 = vpop.permute.xlu0 %624
      %626 = vrot.lane.b32.xlu0 %v146, 12
      %v627 = vpop.permute.xlu0 %626
      %628 = vrot.lane.b32.xlu0 %v148, 12
      %v629 = vpop.permute.xlu0 %628
      %630 = vrot.lane.b32.xlu0 %v149, 12
      %v631 = vpop.permute.xlu0 %630
      %632 = vrot.lane.b32.xlu0 %v151, 12
      %v633 = vpop.permute.xlu0 %632
      %634 = vrot.lane.b32.xlu0 %v152, 12
      %v635 = vpop.permute.xlu0 %634
      %636 = vrot.lane.b32.xlu0 %v154, 12
      %v637 = vpop.permute.xlu0 %636
      %638 = vrot.lane.b32.xlu0 %v155, 12
      %v639 = vpop.permute.xlu0 %638
      %640 = vrot.lane.b32.xlu0 %v157, 12
      %v641 = vpop.permute.xlu0 %640
      %642 = vrot.lane.b32.xlu0 %v158, 12
      %v643 = vpop.permute.xlu0 %642
      %644 = vrot.lane.b32.xlu0 %v160, 12
      %v645 = vpop.permute.xlu0 %644
      %646 = vrot.lane.b32.xlu0 %v161, 12
      %v647 = vpop.permute.xlu0 %646
      %648 = vrot.lane.b32.xlu0 %v163, 12
      %v649 = vpop.permute.xlu0 %648
      %650 = vrot.lane.b32.xlu0 %v164, 12
      %v651 = vpop.permute.xlu0 %650
      %652 = vrot.lane.b32.xlu0 %v166, 12
      %v653 = vpop.permute.xlu0 %652
      %654 = vrot.lane.b32.xlu0 %v167, 12
      %v655 = vpop.permute.xlu0 %654
      %656 = vrot.lane.b32.xlu0 %v169, 12
      %v657 = vpop.permute.xlu0 %656
      %658 = vrot.lane.b32.xlu0 %v170, 12
      %v659 = vpop.permute.xlu0 %658
      %660 = vrot.lane.b32.xlu0 %v172, 12
      %v661 = vpop.permute.xlu0 %660
      %662 = vrot.lane.b32.xlu0 %v173, 12
      %v663 = vpop.permute.xlu0 %662
      %664 = vrot.lane.b32.xlu0 %v175, 12
      %v665 = vpop.permute.xlu0 %664
      %666 = vrot.lane.b32.xlu0 %v176, 12
      %v667 = vpop.permute.xlu0 %666
      %668 = vrot.lane.b32.xlu0 %v178, 12
      %v669 = vpop.permute.xlu0 %668
      %670 = vrot.lane.b32.xlu0 %v179, 12
      %v671 = vpop.permute.xlu0 %670
      %672 = vrot.lane.b32.xlu0 %v181, 12
      %v673 = vpop.permute.xlu0 %672
      %674 = vrot.lane.b32.xlu0 %v182, 12
      %v675 = vpop.permute.xlu0 %674
      %676 = vrot.lane.b32.xlu0 %v184, 12
      %v677 = vpop.permute.xlu0 %676
      %678 = vrot.lane.b32.xlu0 %v185, 12
      %v679 = vpop.permute.xlu0 %678
      %680 = vrot.lane.b32.xlu0 %v187, 12
      %v681 = vpop.permute.xlu0 %680
      %682 = vrot.lane.b32.xlu0 %v188, 12
      %v683 = vpop.permute.xlu0 %682
      %684 = vrot.lane.b32.xlu0 %v190, 12
      %v685 = vpop.permute.xlu0 %684
      %686 = vrot.lane.b32.xlu0 %v191, 12
      %v687 = vpop.permute.xlu0 %686
      %720 = vrot.lane.b32.xlu0 %v252, 16
      %v721 = vpop.permute.xlu0 %720
      %722 = vrot.lane.b32.xlu0 %v254, 16
      %v723 = vpop.permute.xlu0 %722
      %724 = vrot.lane.b32.xlu0 %v257, 16
      %v725 = vpop.permute.xlu0 %724
      %726 = vrot.lane.b32.xlu0 %v259, 16
      %v727 = vpop.permute.xlu0 %726
      %728 = vrot.lane.b32.xlu0 %v262, 16
      %v729 = vpop.permute.xlu0 %728
      %730 = vrot.lane.b32.xlu0 %v264, 16
      %v731 = vpop.permute.xlu0 %730
      %732 = vrot.lane.b32.xlu0 %v267, 16
      %v733 = vpop.permute.xlu0 %732
      %734 = vrot.lane.b32.xlu0 %v269, 16
      %v735 = vpop.permute.xlu0 %734
      %736 = vrot.lane.b32.xlu0 %v272, 16
      %v737 = vpop.permute.xlu0 %736
      %738 = vrot.lane.b32.xlu0 %v274, 16
      %v739 = vpop.permute.xlu0 %738
      %740 = vrot.lane.b32.xlu0 %v277, 16
      %v741 = vpop.permute.xlu0 %740
      %742 = vrot.lane.b32.xlu0 %v279, 16
      %v743 = vpop.permute.xlu0 %742
      %744 = vrot.lane.b32.xlu0 %v282, 16
      %v745 = vpop.permute.xlu0 %744
      %746 = vrot.lane.b32.xlu0 %v284, 16
      %v747 = vpop.permute.xlu0 %746
      %748 = vrot.lane.b32.xlu0 %v287, 16
      %v749 = vpop.permute.xlu0 %748
      %750 = vrot.lane.b32.xlu0 %v289, 16
      %v751 = vpop.permute.xlu0 %750
      %752 = vrot.lane.b32.xlu0 %v292, 16
      %v753 = vpop.permute.xlu0 %752
      %754 = vrot.lane.b32.xlu0 %v294, 16
      %v755 = vpop.permute.xlu0 %754
      %756 = vrot.lane.b32.xlu0 %v297, 16
      %v757 = vpop.permute.xlu0 %756
      %758 = vrot.lane.b32.xlu0 %v299, 16
      %v759 = vpop.permute.xlu0 %758
      %760 = vrot.lane.b32.xlu0 %v302, 16
      %v761 = vpop.permute.xlu0 %760
      %762 = vrot.lane.b32.xlu0 %v304, 16
      %v763 = vpop.permute.xlu0 %762
      %764 = vrot.lane.b32.xlu0 %v307, 16
      %v765 = vpop.permute.xlu0 %764
      %766 = vrot.lane.b32.xlu0 %v309, 16
      %v767 = vpop.permute.xlu0 %766
      %768 = vrot.lane.b32.xlu0 %v312, 16
      %v769 = vpop.permute.xlu0 %768
      %770 = vrot.lane.b32.xlu0 %v314, 16
      %v771 = vpop.permute.xlu0 %770
      %772 = vrot.lane.b32.xlu0 %v317, 16
      %v773 = vpop.permute.xlu0 %772
      %774 = vrot.lane.b32.xlu0 %v319, 16
      %v775 = vpop.permute.xlu0 %774
      %776 = vrot.lane.b32.xlu0 %v322, 16
      %v777 = vpop.permute.xlu0 %776
      %778 = vrot.lane.b32.xlu0 %v324, 16
      %v779 = vpop.permute.xlu0 %778
      %780 = vrot.lane.b32.xlu0 %v411, 16
      %v781 = vpop.permute.xlu0 %780
      %782 = vrot.lane.b32.xlu0 %v413, 16
      %v783 = vpop.permute.xlu0 %782
      %816 = vrot.lane.b32.xlu0 %v333, 20
      %v817 = vpop.permute.xlu0 %816
      %818 = vrot.lane.b32.xlu0 %v335, 20
      %v819 = vpop.permute.xlu0 %818
      %820 = vrot.lane.b32.xlu0 %v338, 20
      %v821 = vpop.permute.xlu0 %820
      %822 = vrot.lane.b32.xlu0 %v340, 20
      %v823 = vpop.permute.xlu0 %822
      %824 = vrot.lane.b32.xlu0 %v343, 20
      %v825 = vpop.permute.xlu0 %824
      %826 = vrot.lane.b32.xlu0 %v345, 20
      %v827 = vpop.permute.xlu0 %826
      %828 = vrot.lane.b32.xlu0 %v348, 20
      %v829 = vpop.permute.xlu0 %828
      %830 = vrot.lane.b32.xlu0 %v350, 20
      %v831 = vpop.permute.xlu0 %830
      %832 = vrot.lane.b32.xlu0 %v353, 20
      %v833 = vpop.permute.xlu0 %832
      %834 = vrot.lane.b32.xlu0 %v355, 20
      %v835 = vpop.permute.xlu0 %834
      %836 = vrot.lane.b32.xlu0 %v358, 20
      %v837 = vpop.permute.xlu0 %836
      %838 = vrot.lane.b32.xlu0 %v360, 20
      %v839 = vpop.permute.xlu0 %838
      %840 = vrot.lane.b32.xlu0 %v363, 20
      %v841 = vpop.permute.xlu0 %840
      %842 = vrot.lane.b32.xlu0 %v365, 20
      %v843 = vpop.permute.xlu0 %842
      %844 = vrot.lane.b32.xlu0 %v368, 20
      %v845 = vpop.permute.xlu0 %844
      %846 = vrot.lane.b32.xlu0 %v370, 20
      %v847 = vpop.permute.xlu0 %846
      %848 = vrot.lane.b32.xlu0 %v373, 20
      %v849 = vpop.permute.xlu0 %848
      %850 = vrot.lane.b32.xlu0 %v375, 20
      %v851 = vpop.permute.xlu0 %850
      %852 = vrot.lane.b32.xlu0 %v378, 20
      %v853 = vpop.permute.xlu0 %852
      %854 = vrot.lane.b32.xlu0 %v380, 20
      %v855 = vpop.permute.xlu0 %854
      %856 = vrot.lane.b32.xlu0 %v383, 20
      %v857 = vpop.permute.xlu0 %856
      %858 = vrot.lane.b32.xlu0 %v385, 20
      %v859 = vpop.permute.xlu0 %858
      %860 = vrot.lane.b32.xlu0 %v388, 20
      %v861 = vpop.permute.xlu0 %860
      %862 = vrot.lane.b32.xlu0 %v390, 20
      %v863 = vpop.permute.xlu0 %862
      %864 = vrot.lane.b32.xlu0 %v393, 20
      %v865 = vpop.permute.xlu0 %864
      %866 = vrot.lane.b32.xlu0 %v395, 20
      %v867 = vpop.permute.xlu0 %866
      %868 = vrot.lane.b32.xlu0 %v398, 20
      %v869 = vpop.permute.xlu0 %868
      %870 = vrot.lane.b32.xlu0 %v400, 20
      %v871 = vpop.permute.xlu0 %870
      %872 = vrot.lane.b32.xlu0 %v403, 20
      %v873 = vpop.permute.xlu0 %872
      %874 = vrot.lane.b32.xlu0 %v405, 20
      %v875 = vpop.permute.xlu0 %874
      %876 = vrot.lane.b32.xlu0 %v416, 20
      %v877 = vpop.permute.xlu0 %876
      %878 = vrot.lane.b32.xlu0 %v418, 20
      %v879 = vpop.permute.xlu0 %878
      %912 = vrot.lane.b32.xlu0 %v148, 24
      %v913 = vpop.permute.xlu0 %912
      %914 = vrot.lane.b32.xlu0 %v149, 24
      %v915 = vpop.permute.xlu0 %914
      %916 = vrot.lane.b32.xlu0 %v151, 24
      %v917 = vpop.permute.xlu0 %916
      %918 = vrot.lane.b32.xlu0 %v152, 24
      %v919 = vpop.permute.xlu0 %918
      %920 = vrot.lane.b32.xlu0 %v154, 24
      %v921 = vpop.permute.xlu0 %920
      %922 = vrot.lane.b32.xlu0 %v155, 24
      %v923 = vpop.permute.xlu0 %922
      %924 = vrot.lane.b32.xlu0 %v157, 24
      %v925 = vpop.permute.xlu0 %924
      %926 = vrot.lane.b32.xlu0 %v158, 24
      %v927 = vpop.permute.xlu0 %926
      %928 = vrot.lane.b32.xlu0 %v160, 24
      %v929 = vpop.permute.xlu0 %928
      %930 = vrot.lane.b32.xlu0 %v161, 24
      %v931 = vpop.permute.xlu0 %930
      %932 = vrot.lane.b32.xlu0 %v163, 24
      %v933 = vpop.permute.xlu0 %932
      %934 = vrot.lane.b32.xlu0 %v164, 24
      %v935 = vpop.permute.xlu0 %934
      %936 = vrot.lane.b32.xlu0 %v166, 24
      %v937 = vpop.permute.xlu0 %936
      %938 = vrot.lane.b32.xlu0 %v167, 24
      %v939 = vpop.permute.xlu0 %938
      %940 = vrot.lane.b32.xlu0 %v169, 24
      %v941 = vpop.permute.xlu0 %940
      %942 = vrot.lane.b32.xlu0 %v170, 24
      %v943 = vpop.permute.xlu0 %942
      %944 = vrot.lane.b32.xlu0 %v172, 24
      %v945 = vpop.permute.xlu0 %944
      %946 = vrot.lane.b32.xlu0 %v173, 24
      %v947 = vpop.permute.xlu0 %946
      %948 = vrot.lane.b32.xlu0 %v175, 24
      %v949 = vpop.permute.xlu0 %948
      %950 = vrot.lane.b32.xlu0 %v176, 24
      %v951 = vpop.permute.xlu0 %950
      %952 = vrot.lane.b32.xlu0 %v178, 24
      %v953 = vpop.permute.xlu0 %952
      %954 = vrot.lane.b32.xlu0 %v179, 24
      %v955 = vpop.permute.xlu0 %954
      %956 = vrot.lane.b32.xlu0 %v181, 24
      %v957 = vpop.permute.xlu0 %956
      %958 = vrot.lane.b32.xlu0 %v182, 24
      %v959 = vpop.permute.xlu0 %958
      %960 = vrot.lane.b32.xlu0 %v184, 24
      %v961 = vpop.permute.xlu0 %960
      %962 = vrot.lane.b32.xlu0 %v185, 24
      %v963 = vpop.permute.xlu0 %962
      %964 = vrot.lane.b32.xlu0 %v187, 24
      %v965 = vpop.permute.xlu0 %964
      %966 = vrot.lane.b32.xlu0 %v188, 24
      %v967 = vpop.permute.xlu0 %966
      %968 = vrot.lane.b32.xlu0 %v190, 24
      %v969 = vpop.permute.xlu0 %968
      %970 = vrot.lane.b32.xlu0 %v191, 24
      %v971 = vpop.permute.xlu0 %970
      %972 = vrot.lane.b32.xlu0 %v193, 24
      %v973 = vpop.permute.xlu0 %972
      %974 = vrot.lane.b32.xlu0 %v194, 24
      %v975 = vpop.permute.xlu0 %974
      %1008 = vrot.lane.b32.xlu0 %v257, 28
      %v1009 = vpop.permute.xlu0 %1008
      %1010 = vrot.lane.b32.xlu0 %v259, 28
      %v1011 = vpop.permute.xlu0 %1010
      %1012 = vrot.lane.b32.xlu0 %v262, 28
      %v1013 = vpop.permute.xlu0 %1012
      %1014 = vrot.lane.b32.xlu0 %v264, 28
      %v1015 = vpop.permute.xlu0 %1014
      %1016 = vrot.lane.b32.xlu0 %v267, 28
      %v1017 = vpop.permute.xlu0 %1016
      %1018 = vrot.lane.b32.xlu0 %v269, 28
      %v1019 = vpop.permute.xlu0 %1018
      %1020 = vrot.lane.b32.xlu0 %v272, 28
      %v1021 = vpop.permute.xlu0 %1020
      %1022 = vrot.lane.b32.xlu0 %v274, 28
      %v1023 = vpop.permute.xlu0 %1022
      %1024 = vrot.lane.b32.xlu0 %v277, 28
      %v1025 = vpop.permute.xlu0 %1024
      %1026 = vrot.lane.b32.xlu0 %v279, 28
      %v1027 = vpop.permute.xlu0 %1026
      %1028 = vrot.lane.b32.xlu0 %v282, 28
      %v1029 = vpop.permute.xlu0 %1028
      %1030 = vrot.lane.b32.xlu0 %v284, 28
      %v1031 = vpop.permute.xlu0 %1030
      %1032 = vrot.lane.b32.xlu0 %v287, 28
      %v1033 = vpop.permute.xlu0 %1032
      %1034 = vrot.lane.b32.xlu0 %v289, 28
      %v1035 = vpop.permute.xlu0 %1034
      %1036 = vrot.lane.b32.xlu0 %v292, 28
      %v1037 = vpop.permute.xlu0 %1036
      %1038 = vrot.lane.b32.xlu0 %v294, 28
      %v1039 = vpop.permute.xlu0 %1038
      %1040 = vrot.lane.b32.xlu0 %v297, 28
      %v1041 = vpop.permute.xlu0 %1040
      %1042 = vrot.lane.b32.xlu0 %v299, 28
      %v1043 = vpop.permute.xlu0 %1042
      %1044 = vrot.lane.b32.xlu0 %v302, 28
      %v1045 = vpop.permute.xlu0 %1044
      %1046 = vrot.lane.b32.xlu0 %v304, 28
      %v1047 = vpop.permute.xlu0 %1046
      %1048 = vrot.lane.b32.xlu0 %v307, 28
      %v1049 = vpop.permute.xlu0 %1048
      %1050 = vrot.lane.b32.xlu0 %v309, 28
      %v1051 = vpop.permute.xlu0 %1050
      %1052 = vrot.lane.b32.xlu0 %v312, 28
      %v1053 = vpop.permute.xlu0 %1052
      %1054 = vrot.lane.b32.xlu0 %v314, 28
      %v1055 = vpop.permute.xlu0 %1054
      %1056 = vrot.lane.b32.xlu0 %v317, 28
      %v1057 = vpop.permute.xlu0 %1056
      %1058 = vrot.lane.b32.xlu0 %v319, 28
      %v1059 = vpop.permute.xlu0 %1058
      %1060 = vrot.lane.b32.xlu0 %v322, 28
      %v1061 = vpop.permute.xlu0 %1060
      %1062 = vrot.lane.b32.xlu0 %v324, 28
      %v1063 = vpop.permute.xlu0 %1062
      %1064 = vrot.lane.b32.xlu0 %v411, 28
      %v1065 = vpop.permute.xlu0 %1064
      %1066 = vrot.lane.b32.xlu0 %v413, 28
      %v1067 = vpop.permute.xlu0 %1066
      %1068 = vrot.lane.b32.xlu0 %v424, 28
      %v1069 = vpop.permute.xlu0 %1068
      %1070 = vrot.lane.b32.xlu0 %v426, 28
      %v1071 = vpop.permute.xlu0 %1070
      %1104 = vrot.lane.b32.xlu0 %v338, 32
      %v1105 = vpop.permute.xlu0 %1104
      %1106 = vrot.lane.b32.xlu0 %v340, 32
      %v1107 = vpop.permute.xlu0 %1106
      %1108 = vrot.lane.b32.xlu0 %v343, 32
      %v1109 = vpop.permute.xlu0 %1108
      %1110 = vrot.lane.b32.xlu0 %v345, 32
      %v1111 = vpop.permute.xlu0 %1110
      %1112 = vrot.lane.b32.xlu0 %v348, 32
      %v1113 = vpop.permute.xlu0 %1112
      %1114 = vrot.lane.b32.xlu0 %v350, 32
      %v1115 = vpop.permute.xlu0 %1114
      %1116 = vrot.lane.b32.xlu0 %v353, 32
      %v1117 = vpop.permute.xlu0 %1116
      %1118 = vrot.lane.b32.xlu0 %v355, 32
      %v1119 = vpop.permute.xlu0 %1118
      %1120 = vrot.lane.b32.xlu0 %v358, 32
      %v1121 = vpop.permute.xlu0 %1120
      %1122 = vrot.lane.b32.xlu0 %v360, 32
      %v1123 = vpop.permute.xlu0 %1122
      %1124 = vrot.lane.b32.xlu0 %v363, 32
      %v1125 = vpop.permute.xlu0 %1124
      %1126 = vrot.lane.b32.xlu0 %v365, 32
      %v1127 = vpop.permute.xlu0 %1126
      %1128 = vrot.lane.b32.xlu0 %v368, 32
      %v1129 = vpop.permute.xlu0 %1128
      %1130 = vrot.lane.b32.xlu0 %v370, 32
      %v1131 = vpop.permute.xlu0 %1130
      %1132 = vrot.lane.b32.xlu0 %v373, 32
      %v1133 = vpop.permute.xlu0 %1132
      %1134 = vrot.lane.b32.xlu0 %v375, 32
      %v1135 = vpop.permute.xlu0 %1134
      %1136 = vrot.lane.b32.xlu0 %v378, 32
      %v1137 = vpop.permute.xlu0 %1136
      %1138 = vrot.lane.b32.xlu0 %v380, 32
      %v1139 = vpop.permute.xlu0 %1138
      %1140 = vrot.lane.b32.xlu0 %v383, 32
      %v1141 = vpop.permute.xlu0 %1140
      %1142 = vrot.lane.b32.xlu0 %v385, 32
      %v1143 = vpop.permute.xlu0 %1142
      %1144 = vrot.lane.b32.xlu0 %v388, 32
      %v1145 = vpop.permute.xlu0 %1144
      %1146 = vrot.lane.b32.xlu0 %v390, 32
      %v1147 = vpop.permute.xlu0 %1146
      %1148 = vrot.lane.b32.xlu0 %v393, 32
      %v1149 = vpop.permute.xlu0 %1148
      %1150 = vrot.lane.b32.xlu0 %v395, 32
      %v1151 = vpop.permute.xlu0 %1150
      %1152 = vrot.lane.b32.xlu0 %v398, 32
      %v1153 = vpop.permute.xlu0 %1152
      %1154 = vrot.lane.b32.xlu0 %v400, 32
      %v1155 = vpop.permute.xlu0 %1154
      %1156 = vrot.lane.b32.xlu0 %v403, 32
      %v1157 = vpop.permute.xlu0 %1156
      %1158 = vrot.lane.b32.xlu0 %v405, 32
      %v1159 = vpop.permute.xlu0 %1158
      %1160 = vrot.lane.b32.xlu0 %v416, 32
      %v1161 = vpop.permute.xlu0 %1160
      %1162 = vrot.lane.b32.xlu0 %v418, 32
      %v1163 = vpop.permute.xlu0 %1162
      %1164 = vrot.lane.b32.xlu0 %v429, 32
      %v1165 = vpop.permute.xlu0 %1164
      %1166 = vrot.lane.b32.xlu0 %v431, 32
      %v1167 = vpop.permute.xlu0 %1166
      %vm1200 = vcmask 31744
      %v1201 = vsel %vm1200, %v142, %v433
      %v1202 = vsel %vm1200, %v143, %v435
      %v1203 = vsel %vm1200, %v145, %v437
      %v1204 = vsel %vm1200, %v146, %v439
      %v1205 = vsel %vm1200, %v148, %v441
      %v1206 = vsel %vm1200, %v149, %v443
      %v1207 = vsel %vm1200, %v151, %v445
      %v1208 = vsel %vm1200, %v152, %v447
      %v1209 = vsel %vm1200, %v154, %v449
      %v1210 = vsel %vm1200, %v155, %v451
      %v1211 = vsel %vm1200, %v157, %v453
      %v1212 = vsel %vm1200, %v158, %v455
      %v1213 = vsel %vm1200, %v160, %v457
      %v1214 = vsel %vm1200, %v161, %v459
      %v1215 = vsel %vm1200, %v163, %v461
      %v1216 = vsel %vm1200, %v164, %v463
      %v1217 = vsel %vm1200, %v166, %v465
      %v1218 = vsel %vm1200, %v167, %v467
      %v1219 = vsel %vm1200, %v169, %v469
      %v1220 = vsel %vm1200, %v170, %v471
      %v1221 = vsel %vm1200, %v172, %v473
      %v1222 = vsel %vm1200, %v173, %v475
      %v1223 = vsel %vm1200, %v175, %v477
      %v1224 = vsel %vm1200, %v176, %v479
      %v1225 = vsel %vm1200, %v178, %v481
      %v1226 = vsel %vm1200, %v179, %v483
      %v1227 = vsel %vm1200, %v181, %v485
      %v1228 = vsel %vm1200, %v182, %v487
      %v1229 = vsel %vm1200, %v184, %v489
      %v1230 = vsel %vm1200, %v185, %v491
      %v1231 = vsel %vm1200, %v187, %v493
      %v1232 = vsel %vm1200, %v188, %v495
      %vm1233 = vcmask 64512
      %v1234 = vsel %vm1233, %v1201, %v529
      %v1235 = vsel %vm1233, %v1202, %v531
      %v1236 = vsel %vm1233, %v1203, %v533
      %v1237 = vsel %vm1233, %v1204, %v535
      %v1238 = vsel %vm1233, %v1205, %v537
      %v1239 = vsel %vm1233, %v1206, %v539
      %v1240 = vsel %vm1233, %v1207, %v541
      %v1241 = vsel %vm1233, %v1208, %v543
      %v1242 = vsel %vm1233, %v1209, %v545
      %v1243 = vsel %vm1233, %v1210, %v547
      %v1244 = vsel %vm1233, %v1211, %v549
      %v1245 = vsel %vm1233, %v1212, %v551
      %v1246 = vsel %vm1233, %v1213, %v553
      %v1247 = vsel %vm1233, %v1214, %v555
      %v1248 = vsel %vm1233, %v1215, %v557
      %v1249 = vsel %vm1233, %v1216, %v559
      %v1250 = vsel %vm1233, %v1217, %v561
      %v1251 = vsel %vm1233, %v1218, %v563
      %v1252 = vsel %vm1233, %v1219, %v565
      %v1253 = vsel %vm1233, %v1220, %v567
      %v1254 = vsel %vm1233, %v1221, %v569
      %v1255 = vsel %vm1233, %v1222, %v571
      %v1256 = vsel %vm1233, %v1223, %v573
      %v1257 = vsel %vm1233, %v1224, %v575
      %v1258 = vsel %vm1233, %v1225, %v577
      %v1259 = vsel %vm1233, %v1226, %v579
      %v1260 = vsel %vm1233, %v1227, %v581
      %v1261 = vsel %vm1233, %v1228, %v583
      %v1262 = vsel %vm1233, %v1229, %v585
      %v1263 = vsel %vm1233, %v1230, %v587
      %v1264 = vsel %vm1233, %v1231, %v589
      %v1265 = vsel %vm1233, %v1232, %v591
      %vm1266 = vcmask 97280
      %v1267 = vsel %vm1266, %v1234, %v625
      %v1268 = vsel %vm1266, %v1235, %v627
      %v1269 = vsel %vm1266, %v1236, %v629
      %v1270 = vsel %vm1266, %v1237, %v631
      %v1271 = vsel %vm1266, %v1238, %v633
      %v1272 = vsel %vm1266, %v1239, %v635
      %v1273 = vsel %vm1266, %v1240, %v637
      %v1274 = vsel %vm1266, %v1241, %v639
      %v1275 = vsel %vm1266, %v1242, %v641
      %v1276 = vsel %vm1266, %v1243, %v643
      %v1277 = vsel %vm1266, %v1244, %v645
      %v1278 = vsel %vm1266, %v1245, %v647
      %v1279 = vsel %vm1266, %v1246, %v649
      %v1280 = vsel %vm1266, %v1247, %v651
      %v1281 = vsel %vm1266, %v1248, %v653
      %v1282 = vsel %vm1266, %v1249, %v655
      %v1283 = vsel %vm1266, %v1250, %v657
      %v1284 = vsel %vm1266, %v1251, %v659
      %v1285 = vsel %vm1266, %v1252, %v661
      %v1286 = vsel %vm1266, %v1253, %v663
      %v1287 = vsel %vm1266, %v1254, %v665
      %v1288 = vsel %vm1266, %v1255, %v667
      %v1289 = vsel %vm1266, %v1256, %v669
      %v1290 = vsel %vm1266, %v1257, %v671
      %v1291 = vsel %vm1266, %v1258, %v673
      %v1292 = vsel %vm1266, %v1259, %v675
      %v1293 = vsel %vm1266, %v1260, %v677
      %v1294 = vsel %vm1266, %v1261, %v679
      %v1295 = vsel %vm1266, %v1262, %v681
      %v1296 = vsel %vm1266, %v1263, %v683
      %v1297 = vsel %vm1266, %v1264, %v685
      %v1298 = vsel %vm1266, %v1265, %v687
      %vm1299 = vcmask 130048
      %v1300 = vsel %vm1299, %v1267, %v721
      %v1301 = vsel %vm1299, %v1268, %v723
      %v1302 = vsel %vm1299, %v1269, %v725
      %v1303 = vsel %vm1299, %v1270, %v727
      %v1304 = vsel %vm1299, %v1271, %v729
      %v1305 = vsel %vm1299, %v1272, %v731
      %v1306 = vsel %vm1299, %v1273, %v733
      %v1307 = vsel %vm1299, %v1274, %v735
      %v1308 = vsel %vm1299, %v1275, %v737
      %v1309 = vsel %vm1299, %v1276, %v739
      %v1310 = vsel %vm1299, %v1277, %v741
      %v1311 = vsel %vm1299, %v1278, %v743
      %v1312 = vsel %vm1299, %v1279, %v745
      %v1313 = vsel %vm1299, %v1280, %v747
      %v1314 = vsel %vm1299, %v1281, %v749
      %v1315 = vsel %vm1299, %v1282, %v751
      %v1316 = vsel %vm1299, %v1283, %v753
      %v1317 = vsel %vm1299, %v1284, %v755
      %v1318 = vsel %vm1299, %v1285, %v757
      %v1319 = vsel %vm1299, %v1286, %v759
      %v1320 = vsel %vm1299, %v1287, %v761
      %v1321 = vsel %vm1299, %v1288, %v763
      %v1322 = vsel %vm1299, %v1289, %v765
      %v1323 = vsel %vm1299, %v1290, %v767
      %v1324 = vsel %vm1299, %v1291, %v769
      %v1325 = vsel %vm1299, %v1292, %v771
      %v1326 = vsel %vm1299, %v1293, %v773
      %v1327 = vsel %vm1299, %v1294, %v775
      %v1328 = vsel %vm1299, %v1295, %v777
      %v1329 = vsel %vm1299, %v1296, %v779
      %v1330 = vsel %vm1299, %v1297, %v781
      %v1331 = vsel %vm1299, %v1298, %v783
      %vm1332 = vcmask 162816
      %v1333 = vsel %vm1332, %v1300, %v817
      %v1334 = vsel %vm1332, %v1301, %v819
      %v1335 = vsel %vm1332, %v1302, %v821
      %v1336 = vsel %vm1332, %v1303, %v823
      %v1337 = vsel %vm1332, %v1304, %v825
      %v1338 = vsel %vm1332, %v1305, %v827
      %v1339 = vsel %vm1332, %v1306, %v829
      %v1340 = vsel %vm1332, %v1307, %v831
      %v1341 = vsel %vm1332, %v1308, %v833
      %v1342 = vsel %vm1332, %v1309, %v835
      %v1343 = vsel %vm1332, %v1310, %v837
      %v1344 = vsel %vm1332, %v1311, %v839
      %v1345 = vsel %vm1332, %v1312, %v841
      %v1346 = vsel %vm1332, %v1313, %v843
      %v1347 = vsel %vm1332, %v1314, %v845
      %v1348 = vsel %vm1332, %v1315, %v847
      %v1349 = vsel %vm1332, %v1316, %v849
      %v1350 = vsel %vm1332, %v1317, %v851
      %v1351 = vsel %vm1332, %v1318, %v853
      %v1352 = vsel %vm1332, %v1319, %v855
      %v1353 = vsel %vm1332, %v1320, %v857
      %v1354 = vsel %vm1332, %v1321, %v859
      %v1355 = vsel %vm1332, %v1322, %v861
      %v1356 = vsel %vm1332, %v1323, %v863
      %v1357 = vsel %vm1332, %v1324, %v865
      %v1358 = vsel %vm1332, %v1325, %v867
      %v1359 = vsel %vm1332, %v1326, %v869
      %v1360 = vsel %vm1332, %v1327, %v871
      %v1361 = vsel %vm1332, %v1328, %v873
      %v1362 = vsel %vm1332, %v1329, %v875
      %v1363 = vsel %vm1332, %v1330, %v877
      %v1364 = vsel %vm1332, %v1331, %v879
      %vm1365 = vcmask 195584
      %v1366 = vsel %vm1365, %v1333, %v913
      %v1367 = vsel %vm1365, %v1334, %v915
      %v1368 = vsel %vm1365, %v1335, %v917
      %v1369 = vsel %vm1365, %v1336, %v919
      %v1370 = vsel %vm1365, %v1337, %v921
      %v1371 = vsel %vm1365, %v1338, %v923
      %v1372 = vsel %vm1365, %v1339, %v925
      %v1373 = vsel %vm1365, %v1340, %v927
      %v1374 = vsel %vm1365, %v1341, %v929
      %v1375 = vsel %vm1365, %v1342, %v931
      %v1376 = vsel %vm1365, %v1343, %v933
      %v1377 = vsel %vm1365, %v1344, %v935
      %v1378 = vsel %vm1365, %v1345, %v937
      %v1379 = vsel %vm1365, %v1346, %v939
      %v1380 = vsel %vm1365, %v1347, %v941
      %v1381 = vsel %vm1365, %v1348, %v943
      %v1382 = vsel %vm1365, %v1349, %v945
      %v1383 = vsel %vm1365, %v1350, %v947
      %v1384 = vsel %vm1365, %v1351, %v949
      %v1385 = vsel %vm1365, %v1352, %v951
      %v1386 = vsel %vm1365, %v1353, %v953
      %v1387 = vsel %vm1365, %v1354, %v955
      %v1388 = vsel %vm1365, %v1355, %v957
      %v1389 = vsel %vm1365, %v1356, %v959
      %v1390 = vsel %vm1365, %v1357, %v961
      %v1391 = vsel %vm1365, %v1358, %v963
      %v1392 = vsel %vm1365, %v1359, %v965
      %v1393 = vsel %vm1365, %v1360, %v967
      %v1394 = vsel %vm1365, %v1361, %v969
      %v1395 = vsel %vm1365, %v1362, %v971
      %v1396 = vsel %vm1365, %v1363, %v973
      %v1397 = vsel %vm1365, %v1364, %v975
      %vm1398 = vcmask 228352
      %v1399 = vsel %vm1398, %v1366, %v1009
      %v1400 = vsel %vm1398, %v1367, %v1011
      %v1401 = vsel %vm1398, %v1368, %v1013
      %v1402 = vsel %vm1398, %v1369, %v1015
      %v1403 = vsel %vm1398, %v1370, %v1017
      %v1404 = vsel %vm1398, %v1371, %v1019
      %v1405 = vsel %vm1398, %v1372, %v1021
      %v1406 = vsel %vm1398, %v1373, %v1023
      %v1407 = vsel %vm1398, %v1374, %v1025
      %v1408 = vsel %vm1398, %v1375, %v1027
      %v1409 = vsel %vm1398, %v1376, %v1029
      %v1410 = vsel %vm1398, %v1377, %v1031
      %v1411 = vsel %vm1398, %v1378, %v1033
      %v1412 = vsel %vm1398, %v1379, %v1035
      %v1413 = vsel %vm1398, %v1380, %v1037
      %v1414 = vsel %vm1398, %v1381, %v1039
      %v1415 = vsel %vm1398, %v1382, %v1041
      %v1416 = vsel %vm1398, %v1383, %v1043
      %v1417 = vsel %vm1398, %v1384, %v1045
      %v1418 = vsel %vm1398, %v1385, %v1047
      %v1419 = vsel %vm1398, %v1386, %v1049
      %v1420 = vsel %vm1398, %v1387, %v1051
      %v1421 = vsel %vm1398, %v1388, %v1053
      %v1422 = vsel %vm1398, %v1389, %v1055
      %v1423 = vsel %vm1398, %v1390, %v1057
      %v1424 = vsel %vm1398, %v1391, %v1059
      %v1425 = vsel %vm1398, %v1392, %v1061
      %v1426 = vsel %vm1398, %v1393, %v1063
      %v1427 = vsel %vm1398, %v1394, %v1065
      %v1428 = vsel %vm1398, %v1395, %v1067
      %v1429 = vsel %vm1398, %v1396, %v1069
      %v1430 = vsel %vm1398, %v1397, %v1071
      %vm1431 = vcmask 261120
      %v1432 = vsel %vm1431, %v1399, %v1105
      %v1433 = vsel %vm1431, %v1400, %v1107
      %v1434 = vsel %vm1431, %v1401, %v1109
      %v1435 = vsel %vm1431, %v1402, %v1111
      %v1436 = vsel %vm1431, %v1403, %v1113
      %v1437 = vsel %vm1431, %v1404, %v1115
      %v1438 = vsel %vm1431, %v1405, %v1117
      %v1439 = vsel %vm1431, %v1406, %v1119
      %v1440 = vsel %vm1431, %v1407, %v1121
      %v1441 = vsel %vm1431, %v1408, %v1123
      %v1442 = vsel %vm1431, %v1409, %v1125
      %v1443 = vsel %vm1431, %v1410, %v1127
      %v1444 = vsel %vm1431, %v1411, %v1129
      %v1445 = vsel %vm1431, %v1412, %v1131
      %v1446 = vsel %vm1431, %v1413, %v1133
      %v1447 = vsel %vm1431, %v1414, %v1135
      %v1448 = vsel %vm1431, %v1415, %v1137
      %v1449 = vsel %vm1431, %v1416, %v1139
      %v1450 = vsel %vm1431, %v1417, %v1141
      %v1451 = vsel %vm1431, %v1418, %v1143
      %v1452 = vsel %vm1431, %v1419, %v1145
      %v1453 = vsel %vm1431, %v1420, %v1147
      %v1454 = vsel %vm1431, %v1421, %v1149
      %v1455 = vsel %vm1431, %v1422, %v1151
      %v1456 = vsel %vm1431, %v1423, %v1153
      %v1457 = vsel %vm1431, %v1424, %v1155
      %v1458 = vsel %vm1431, %v1425, %v1157
      %v1459 = vsel %vm1431, %v1426, %v1159
      %v1460 = vsel %vm1431, %v1427, %v1161
      %v1461 = vsel %vm1431, %v1428, %v1163
      %v1462 = vsel %vm1431, %v1429, %v1165
      %v1463 = vsel %vm1431, %v1430, %v1167
      %v1464 = vld [vmem:[%s1] sm:$0xff]
      %vm1465 = vcmask 293888
      %v1467 = vsel %vm1465, %v1464, 0
      %v1470 = vsel %vm1465, %v1432, 0
      %v1473 = vsel %vm1465, %v1433, 0
      %v1476 = vsel %vm1465, %v1434, 0
      %v1479 = vsel %vm1465, %v1435, 0
      %v1482 = vsel %vm1465, %v1436, 0
      %v1485 = vsel %vm1465, %v1437, 0
      %v1488 = vsel %vm1465, %v1438, 0
      %v1491 = vsel %vm1465, %v1439, 0
      %v1494 = vsel %vm1465, %v1440, 0
      %v1497 = vsel %vm1465, %v1441, 0
      %v1500 = vsel %vm1465, %v1442, 0
      %v1503 = vsel %vm1465, %v1443, 0
      %v1506 = vsel %vm1465, %v1444, 0
      %v1509 = vsel %vm1465, %v1445, 0
      %v1512 = vsel %vm1465, %v1446, 0
      %v1515 = vsel %vm1465, %v1447, 0
      %v1518 = vsel %vm1465, %v1448, 0
      %v1521 = vsel %vm1465, %v1449, 0
      %v1524 = vsel %vm1465, %v1450, 0
      %v1527 = vsel %vm1465, %v1451, 0
      %v1530 = vsel %vm1465, %v1452, 0
      %v1533 = vsel %vm1465, %v1453, 0
      %v1536 = vsel %vm1465, %v1454, 0
      %v1539 = vsel %vm1465, %v1455, 0
      %v1542 = vsel %vm1465, %v1456, 0
      %v1545 = vsel %vm1465, %v1457, 0
      %v1548 = vsel %vm1465, %v1458, 0
      %v1551 = vsel %vm1465, %v1459, 0
      %v1554 = vsel %vm1465, %v1460, 0
      %v1557 = vsel %vm1465, %v1461, 0
      %v1560 = vsel %vm1465, %v1462, 0
      %v1563 = vsel %vm1465, %v1463, 0
      %1565 = vmatprep.subr.mxu0 0.0
      %1566 = vmatpush1.xpose.msra.mxu0 %v1470
      %1567 = vmatprep.subr.mxu0 0.0
      %1568 = vmatpush1.xpose.msra.mxu0 %v1473
      %1569 = vmatprep.subr.mxu0 0.0
      %1570 = vmatpush1.xpose.msra.mxu0 %v1476
      %1571 = vmatprep.subr.mxu0 0.0
      %1572 = vmatpush1.xpose.msra.mxu0 %v1479
      %1573 = vmatprep.subr.mxu0 0.0
      %1574 = vmatpush1.xpose.msra.mxu0 %v1482
      %1575 = vmatprep.subr.mxu0 0.0
      %1576 = vmatpush1.xpose.msra.mxu0 %v1485
      %1577 = vmatprep.subr.mxu0 0.0
      %1578 = vmatpush1.xpose.msra.mxu0 %v1488
      %1579 = vmatprep.subr.mxu0 0.0
      %1580 = vmatpush1.xpose.msra.mxu0 %v1491
      %1581 = vmatprep.subr.mxu0 0.0
      %1582 = vmatpush1.xpose.msra.mxu0 %v1494
      %1583 = vmatprep.subr.mxu0 0.0
      %1584 = vmatpush1.xpose.msra.mxu0 %v1497
      %1585 = vmatprep.subr.mxu0 0.0
      %1586 = vmatpush1.xpose.msra.mxu0 %v1500
      %1587 = vmatprep.subr.mxu0 0.0
      %1588 = vmatpush1.xpose.msra.mxu0 %v1503
      %1589 = vmatprep.subr.mxu0 0.0
      %1590 = vmatpush1.xpose.msra.mxu0 %v1506
      %1591 = vmatprep.subr.mxu0 0.0
      %1592 = vmatpush1.xpose.msra.mxu0 %v1509
      %1593 = vmatprep.subr.mxu0 0.0
      %1594 = vmatpush1.xpose.msra.mxu0 %v1512
      %1595 = vmatprep.subr.mxu0 0.0
      %1596 = vmatpush1.xpose.msra.mxu0 %v1515
      %1597 = vmatprep.subr.mxu0 0.0
      %1598 = vmatpush1.xpose.msra.mxu0 %v1518
      %1599 = vmatprep.subr.mxu0 0.0
      %1600 = vmatpush1.xpose.msra.mxu0 %v1521
      %1601 = vmatprep.subr.mxu0 0.0
      %1602 = vmatpush1.xpose.msra.mxu0 %v1524
      %1603 = vmatprep.subr.mxu0 0.0
      %1604 = vmatpush1.xpose.msra.mxu0 %v1527
      %1605 = vmatprep.subr.mxu0 0.0
      %1606 = vmatpush1.xpose.msra.mxu0 %v1530
      %1607 = vmatprep.subr.mxu0 0.0
      %1608 = vmatpush1.xpose.msra.mxu0 %v1533
      %1609 = vmatprep.subr.mxu0 0.0
      %1610 = vmatpush1.xpose.msra.mxu0 %v1536
      %1611 = vmatprep.subr.mxu0 0.0
      %1612 = vmatpush1.xpose.msra.mxu0 %v1539
      %1613 = vmatprep.subr.mxu0 0.0
      %1614 = vmatpush1.xpose.msra.mxu0 %v1542
      %1615 = vmatprep.subr.mxu0 0.0
      %1616 = vmatpush1.xpose.msra.mxu0 %v1545
      %1617 = vmatprep.subr.mxu0 0.0
      %1618 = vmatpush1.xpose.msra.mxu0 %v1548
      %1619 = vmatprep.subr.mxu0 0.0
      %1620 = vmatpush1.xpose.msra.mxu0 %v1551
      %1621 = vmatprep.subr.mxu0 0.0
      %1622 = vmatpush1.xpose.msra.mxu0 %v1554
      %1623 = vmatprep.subr.mxu0 0.0
      %1624 = vmatpush1.xpose.msra.mxu0 %v1557
      %1625 = vmatprep.subr.mxu0 0.0
      %1626 = vmatpush1.xpose.msra.mxu0 %v1560
      %1627 = vmatprep.subr.mxu0 0.0
      %1628 = vmatpush1.xpose.msra.mxu0 %v1563
      %1629 = vmatprep.mubr.f32.mxu0 0.0
      %1630 = vmatmul.mubr.f32.gmra.mrb[0].mxu0 %v1467
      %v1631 = vpop.f32.mrb[0].mxu0
      %v1632 = vadd.f32 0.0, %v1631
      %v1633 = vpop.f32.mrb[0].mxu0
      %v1634 = vadd.f32 0.0, %v1633
      %1635 = vdwg.mxu0
      %v1636 = vadd.f32 %v1632, %v1634
      %1637 = vadd.xlane.f32.xlu0 %v1636
      %v1638 = vpop.xlane.xlu0 %1637
      %v1639 = vmul.f32 %v1632, %v1632
      %v1640 = vmul.f32 %v1634, %v1634
      %v1641 = vadd.f32 %v1639, %v1640
      %1642 = vadd.xlane.f32.xlu0 %v1641
      %v1643 = vpop.xlane.xlu0 %1642
      %vm1644 = vcmask 7168
      %v1645 = vsel %vm1644, %v1638, %v1643
      %vm1646 = vcmask 15360
      %1647 = vst.msk [vmem:[%s141] sm:$0xff] %vm1646, %v1645
      %p1648 = scmp.lt.s32.totalorder %s13, 1
      %s1649 = scalar_select %p1648, %s13, 1
      %s1650 = smul.addr %s1649, 8
      %s1651 = scalar_lea.vmem %s2, %s1650
      // Predicated region
      $region29: #{conv_bn.2} parent=27 // pred_check
        %p1652 = pneg %p78
      $region30: #{conv_bn.2} parent=27 // pred_check_branch
        %1654 = sbr.rel (%p1652) target = $region32
      $region31: #{conv_bn.2} parent=27 // pred_region
        _
      $region32: #{conv_bn.2} parent=27 // pred_fallthru
        _
    $region28: #{conv_bn.2} parent=5 // pred_fallthru
      _
    %p1655 = scmp.le.s32.totalorder 2, %s8
    // Predicated region
    $region33: #{conv_bn.2} parent=5 // pred_check
      %p1656 = pneg %p1655
    $region34: #{conv_bn.2} parent=5 // pred_check_branch
      %1658 = sbr.rel (%p1656) target = $region36
    $region35: #{conv_bn.2} parent=5 // pred_region
      %s1659 = ssub.s32 %s8, 2
      // Predicated region
      $region37: #{conv_bn.2} parent=35 // pred_check
        %p1660 = pneg %p84
      $region38: #{conv_bn.2} parent=35 // pred_check_branch
        %1662 = sbr.rel (%p1660) target = $region40
      $region39: #{conv_bn.2} parent=35 // pred_region
        %p1663 = scmp.lt.s32.totalorder %s14, 1
        %s1664 = scalar_select %p1663, %s14, 1
        %s1665 = smul.addr %s1664, 8
        %s1666 = scalar_lea.vmem %s2, %s1665
      $region40: #{conv_bn.2} parent=35 // pred_fallthru
        _
    $region36: #{conv_bn.2} parent=5 // pred_fallthru
      _
  $region6: #{conv_bn.2} parent=0 // loop_footer
    %s12 = sadd.s32 1, %s8
  $region7: #{conv_bn.2} parent=0 // loop_footer_branch
    %7 = sbr.rel target = $region3
  $region8: #{conv_bn.2} parent=0 // loop_exit
    _

</llo_original>
